<compile_context>
chip_gen: v6e
topology: v6e:2x2x1
jax: 0.10.0
libtpu: 0.0.40
codegen_flags: <defaults>
</compile_context>

<pallas_src>
import functools

import jax
import jax.numpy as jnp
from jax import lax
from jax.experimental import pallas as pl
from jax.experimental.pallas import tpu as pltpu


def _round_up(n, m):
    return ((n + m - 1) // m) * m


# --------------------------------------------------------------------------
# Kernel
# --------------------------------------------------------------------------
def _nonlocal_flash_kernel(xq_ref, kv_ref, wtt_ref, bt_ref, wo_ref, bo_ref,
                           o_ref,
                           theta_s, m_s, l_s, acc_s,
                           *, ci_p, tk, n_valid, mask_keys, compute_dtype,
                           exp_in_bf16):
    # Grid: (batch, query-tile, key-tile); key axis is the reduction axis.
    ki = pl.program_id(2)
    nk = pl.num_programs(2)

    # ---- per-query-tile init: theta^T projection + online-softmax state ----
    @pl.when(ki == 0)
    def _init():
        xq = xq_ref[0].astype(compute_dtype)                          # (C, TQ)
        # theta^T produced directly (lhs contracted on dim 0, i.e. x^T @ W_t^T);
        # avoids the (Ci_p x TQ) XLU transpose of v1.
        theta_t = lax.dot_general(
            xq, wtt_ref[...], (((0,), (0,)), ((), ())),
            preferred_element_type=jnp.float32)                       # (TQ, Ci_p)
        theta_s[...] = (theta_t + bt_ref[...]).astype(compute_dtype)
        m_s[...] = jnp.full(m_s.shape, -jnp.inf, jnp.float32)
        l_s[...] = jnp.zeros(l_s.shape, jnp.float32)
        acc_s[...] = jnp.zeros(acc_s.shape, jnp.float32)

    # ---- key tile: pre-projected bf16 phi/g stream (no per-step projection) ----
    kv = kv_ref[0]                                                    # (2*Ci_p, TK)
    phi = kv[:ci_p]                                                   # (Ci_p, TK)
    g = kv[ci_p:]                                                     # (Ci_p, TK)

    # ---- scores + online softmax (state updates in f32) ----
    s = jnp.dot(theta_s[...], phi,
                preferred_element_type=jnp.float32)                   # (TQ, TK)
    if mask_keys:
        col = ki * tk + lax.broadcasted_iota(jnp.int32, (1, tk), 1)
        s = jnp.where(col < n_valid, s, -1e30)                        # mask padded keys
    m_prev = m_s[...]                                                  # (TQ, 1)
    m_new = jnp.maximum(m_prev, jnp.max(s, axis=-1, keepdims=True))    # (TQ, 1)
    alpha = jnp.exp(m_prev - m_new)                                    # (TQ, 1)
    if exp_in_bf16:
        # v6e/v7x: bf16 exp ~doubles EUP throughput; l/acc stay f32.
        p = jnp.exp((s - m_new).astype(jnp.bfloat16))
        p_sum = jnp.sum(p.astype(jnp.float32), axis=-1, keepdims=True)
    else:
        p = jnp.exp(s - m_new)
        p_sum = jnp.sum(p, axis=-1, keepdims=True)
    l_s[...] = alpha * l_s[...] + p_sum
    pv = lax.dot_general(p.astype(compute_dtype), g,
                         (((1,), (1,)), ((), ())),
                         preferred_element_type=jnp.float32)           # (TQ, Ci_p)
    acc_s[...] = alpha * acc_s[...] + pv
    m_s[...] = m_new

    # ---- finalize: softmax normalization, output projection, residual ----
    @pl.when(ki == nk - 1)
    def _finalize():
        inv_l = pl.reciprocal(l_s[...], approx=True)                   # (TQ, 1)
        y = (acc_s[...] * inv_l).astype(compute_dtype)                 # (TQ, Ci_p)
        w_y = lax.dot_general(wo_ref[...], y,
                              (((1,), (1,)), ((), ())),
                              preferred_element_type=jnp.float32)      # (C, TQ)
        o_ref[0] = (w_y + bo_ref[...]
                    + xq_ref[0].astype(jnp.float32)).astype(o_ref.dtype)


# --------------------------------------------------------------------------
# Wrapper
# --------------------------------------------------------------------------
def _pick_tile(n_p, max_tile):
    """Largest multiple of 128 <= max_tile that divides n_p (n_p % 128 == 0)."""
    t = max(128, min(max_tile, n_p))
    t = (t // 128) * 128
    while n_p % t != 0:
        t -= 128
    return t


def nonlocal_block_2d(x_nchw, params, *, tq=None, tk=None,
                      compute_dtype=jnp.bfloat16, exp_in_bf16=False):
    B, C, H, W = x_nchw.shape
    N = H * W
    Ci = params["theta_w"].shape[0]
    Ci_p = _round_up(Ci, 128)            # pad inter_channels to lanes (exact)
    N_p = _round_up(N, 128)              # pad spatial tokens to lanes
    mask_keys = (N_p != N)
    x_itemsize = x_nchw.dtype.itemsize

    # ---- VMEM budget derived from the actual chip (v7x-safe fallback) ----
    try:
        vmem_cap = int(getattr(pltpu.get_tpu_info(), "vmem_capacity_bytes",
                               64 << 20))
    except Exception:
        vmem_cap = 64 << 20
    vmem_limit = int(0.85 * vmem_cap)

    def footprint(tq_, tk_):
        b = 2 * C * tq_ * x_itemsize                       # x query tile (2-buf)
        b += 2 * C * tq_ * x_itemsize                      # output tile (2-buf)
        b += 2 * (2 * Ci_p) * tk_ * 2                      # bf16 kv key tile (2-buf)
        b += 2 * (C * Ci_p * 2 + Ci_p * 4 + C * Ci_p * 2 + C * 4)   # weights (2-buf)
        b += tq_ * Ci_p * 2 + 2 * tq_ * 4 + tq_ * Ci_p * 4           # scratch
        return b

    auto_q, auto_k = tq is None, tk is None
    if auto_q:
        tq = _pick_tile(N_p, 1024)
    if auto_k:
        tk = _pick_tile(N_p, 1024)
    # Shrink auto-picked tiles until the footprint sits well inside the budget.
    while footprint(tq, tk) > 0.6 * vmem_limit:
        if auto_q and tq > 128 and (tq >= tk or not (auto_k and tk > 128)):
            tq = _pick_tile(N_p, tq - 128)
        elif auto_k and tk > 128:
            tk = _pick_tile(N_p, tk - 128)
        else:
            break
    assert N_p % tq == 0 and N_p % tk == 0, (N_p, tq, tk)
    nq, nk = N_p // tq, N_p // tk

    # Channels-first token layout (pure reshape of NCHW), padded along N.
    x3 = x_nchw.reshape(B, C, N)
    if mask_keys:
        x3 = jnp.pad(x3, ((0, 0), (0, 0), (0, N_p - N)))

    # --- pack / pad weights (zero padding is mathematically exact) ---
    def pad_rows(w, b):   # (Ci, C) -> (Ci_p, C);  (Ci,) -> (Ci_p,)
        wp = jnp.zeros((Ci_p, C), jnp.float32).at[:Ci].set(w)
        bp = jnp.zeros((Ci_p,), jnp.float32).at[:Ci].set(b)
        return wp, bp

    wph, bph = pad_rows(params["phi_w"], params["phi_b"])
    wg, bg = pad_rows(params["g_w"], params["g_b"])
    w_kv = jnp.concatenate([wph, wg], axis=0)                    # (2*Ci_p, C)
    b_kv = jnp.concatenate([bph, bg], axis=0)                    # (2*Ci_p,)

    wt, _ = pad_rows(params["theta_w"], params["theta_b"])
    wt_t = jnp.transpose(wt).astype(compute_dtype)               # (C, Ci_p)
    bt = jnp.zeros((1, Ci_p), jnp.float32).at[0, :Ci].set(params["theta_b"])
    wo = jnp.zeros((C, Ci_p), jnp.float32).at[:, :Ci].set(
        params["W_w"]).astype(compute_dtype)
    bo = params["W_b"].reshape(C, 1).astype(jnp.float32)

    # --- hoisted phi/g projection: one pass over x, stored bf16 ---
    kv = (jnp.einsum("oc,bcn->bon", w_kv, x3.astype(jnp.float32))
          + b_kv[None, :, None]).astype(compute_dtype)           # (B, 2*Ci_p, N_p)

    grid_spec = pltpu.PrefetchScalarGridSpec(
        num_scalar_prefetch=0,
        grid=(B, nq, nk),
        in_specs=[
            pl.BlockSpec((1, C, tq), lambda b, q, k: (b, 0, q)),       # x query tile (f32)
            pl.BlockSpec((1, 2 * Ci_p, tk), lambda b, q, k: (b, 0, k)),  # kv key tile (bf16)
            pl.BlockSpec((C, Ci_p), lambda b, q, k: (0, 0)),           # theta^T weight
            pl.BlockSpec((1, Ci_p), lambda b, q, k: (0, 0)),           # theta bias
            pl.BlockSpec((C, Ci_p), lambda b, q, k: (0, 0)),           # W weight
            pl.BlockSpec((C, 1), lambda b, q, k: (0, 0)),              # W bias
        ],
        out_specs=pl.BlockSpec((1, C, tq), lambda b, q, k: (b, 0, q)),
        scratch_shapes=[
            pltpu.VMEM((tq, Ci_p), compute_dtype),   # theta^T cache
            pltpu.VMEM((tq, 1), jnp.float32),        # running max m
            pltpu.VMEM((tq, 1), jnp.float32),        # running sum l
            pltpu.VMEM((tq, Ci_p), jnp.float32),     # output accumulator
        ],
    )

    flops = B * (2 * N_p * C * Ci_p           # theta projection
                 + 4 * N_p * N_p * Ci_p       # scores + p@g
                 + 2 * N_p * Ci_p * C)        # output projection
    bytes_accessed = (B * N_p * C * x_itemsize * 2                # x in + out
                      + B * nq * N_p * 2 * Ci_p * 2               # kv key rereads
                      + 2 * (wt_t.size * 2 + wo.size * 2
                             + bt.size * 4 + bo.size * 4))
    cost = pl.CostEstimate(flops=int(flops),
                           transcendentals=int(B * N_p * N_p),
                           bytes_accessed=int(bytes_accessed))

    out3 = pl.pallas_call(
        functools.partial(_nonlocal_flash_kernel, ci_p=Ci_p, tk=tk, n_valid=N,
                          mask_keys=mask_keys, compute_dtype=compute_dtype,
                          exp_in_bf16=exp_in_bf16),
        out_shape=jax.ShapeDtypeStruct((B, C, N_p), x_nchw.dtype),
        grid_spec=grid_spec,
        compiler_params=pltpu.CompilerParams(
            dimension_semantics=("parallel", "parallel", "arbitrary"),
            vmem_limit_bytes=vmem_limit),
        cost_estimate=cost,
    )(x3, kv, wt_t, bt, wo, bo)

    if mask_keys:
        out3 = out3[:, :, :N]
    return out3.reshape(B, C, H, W)


# --------------------------------------------------------------------------
# Pure-JAX reference (mirrors the PyTorch forward) and parameter init
# --------------------------------------------------------------------------
def reference_forward(x_nchw, params):
    B, C, H, W = x_nchw.shape
    N = H * W
    x3 = x_nchw.reshape(B, C, N).astype(jnp.float32)           # (B, C, N)

    def proj(w, b):                                            # 1x1 conv
        return jnp.einsum("oc,bcn->bon", w, x3) + b[None, :, None]

    g_x = proj(params["g_w"], params["g_b"])                   # (B, Ci, N)
    th = proj(params["theta_w"], params["theta_b"])
    ph = proj(params["phi_w"], params["phi_b"])
    f = jnp.einsum("bcn,bcm->bnm", th, ph)                     # (B, N, N)
    p = jax.nn.softmax(f, axis=-1)
    y = jnp.einsum("bnm,bcm->bcn", p, g_x)                     # (B, Ci, N)
    w_y = jnp.einsum("oc,bcn->bon", params["W_w"], y) + params["W_b"][None, :, None]
    z = w_y + x3
    return z.reshape(B, C, H, W).astype(x_nchw.dtype)


def make_params(key, in_channels, inter_channels):
    # Conv2d 1x1 weights stored as (out, in).  NOTE: the PyTorch module
    # zero-inits W (weight & bias) which makes z == x trivially; we use
    # non-zero values so the full attention + projection path is exercised.
    ks = jax.random.split(key, 8)
    C, Ci = in_channels, inter_channels
    return {
        "g_w": 0.1 * jax.random.normal(ks[0], (Ci, C), jnp.float32),
        "g_b": 0.1 * jax.random.normal(ks[1], (Ci,), jnp.float32),
        "theta_w": 0.1 * jax.random.normal(ks[2], (Ci, C), jnp.float32),
        "theta_b": 0.1 * jax.random.normal(ks[3], (Ci,), jnp.float32),
        "phi_w": 0.1 * jax.random.normal(ks[4], (Ci, C), jnp.float32),
        "phi_b": 0.1 * jax.random.normal(ks[5], (Ci,), jnp.float32),
        "W_w": 0.1 * jax.random.normal(ks[6], (C, Ci), jnp.float32),
        "W_b": 0.1 * jax.random.normal(ks[7], (C,), jnp.float32),
    }


if __name__ == "__main__":
    B, C, H, W = 2, 4, 16, 16          # batch=2, in_channels=4, spatial=16x16
    inter_channels = 2

    key = jax.random.PRNGKey(0)
    kx, kp = jax.random.split(key)
    x = jax.random.normal(kx, (B, C, H, W), jnp.float32)
    params = make_params(kp, C, inter_channels)

    # N = 256; tq = tk = 128 -> 2x2 query/key tiles, exercising the online
    # softmax across multiple key tiles (and B*nq = 4 parallel blocks for v7x).
    z = nonlocal_block_2d(x, params, tq=128, tk=128)
    jax.block_until_ready(z)

    z_ref = reference_forward(x, params)
    assert z.shape == (B, C, H, W)
    err = float(jnp.max(jnp.abs(z.astype(jnp.float32) - z_ref.astype(jnp.float32))))
    # bf16 MXU operands / bf16 kv stream (f32 accumulation) vs. all-f32 reference.
    assert err < 2e-2, err

    print("KERNEL_OK")
</pallas_src>

<mosaic_0001>
module attributes {stable_mosaic.version = 11 : i64} {
  func.func @_nonlocal_flash_kernel(%arg0: i32, %arg1: i32, %arg2: i32, %arg3: memref<1x4x128xf32, #tpu.memory_space<vmem>>, %arg4: memref<1x256x128xbf16, #tpu.memory_space<vmem>>, %arg5: memref<4x128xbf16, #tpu.memory_space<vmem>>, %arg6: memref<1x128xf32, #tpu.memory_space<vmem>>, %arg7: memref<4x128xbf16, #tpu.memory_space<vmem>>, %arg8: memref<4x1xf32, #tpu.memory_space<vmem>>, %arg9: memref<1x4x128xf32, #tpu.memory_space<vmem>>, %arg10: memref<128x128xbf16, #tpu.memory_space<vmem>>, %arg11: memref<128x1xf32, #tpu.memory_space<vmem>>, %arg12: memref<128x1xf32, #tpu.memory_space<vmem>>, %arg13: memref<128x128xf32, #tpu.memory_space<vmem>>) attributes {dimension_semantics = [#tpu.dimension_semantics<parallel>, #tpu.dimension_semantics<parallel>, #tpu.dimension_semantics<arbitrary>], iteration_bounds = array<i64: 2, 2, 2>, scalar_prefetch = 0 : i64, scratch_operands = 4 : i64, tpu.core_type = #tpu.core_type<tc>, window_params = [{transform_indices = @transform_0, window_bounds = array<i64: 1, 4, 128>}, {transform_indices = @transform_1, window_bounds = array<i64: 1, 256, 128>}, {pipeline_mode = #tpu.pipeline_mode<synchronous>, transform_indices = @transform_2, window_bounds = array<i64: 4, 128>}, {pipeline_mode = #tpu.pipeline_mode<synchronous>, transform_indices = @transform_3, window_bounds = array<i64: 1, 128>}, {pipeline_mode = #tpu.pipeline_mode<synchronous>, transform_indices = @transform_4, window_bounds = array<i64: 4, 128>}, {pipeline_mode = #tpu.pipeline_mode<synchronous>, transform_indices = @transform_5, window_bounds = array<i64: 4, 1>}, {transform_indices = @transform_6, window_bounds = array<i64: 1, 4, 128>}]} {
    %c0_i32 = arith.constant 0 : i32
    %0 = arith.cmpi eq, %arg2, %c0_i32 : i32
    %1 = arith.extui %0 : i1 to i32
    %c0_i32_0 = arith.constant 0 : i32
    %2 = arith.cmpi ne, %1, %c0_i32_0 : i32
    scf.if %2 {
      %c0_21 = arith.constant 0 : index
      %c0_22 = arith.constant 0 : index
      %c0_23 = arith.constant 0 : index
      %35 = vector.load %arg3[%c0_21, %c0_22, %c0_23] : memref<1x4x128xf32, #tpu.memory_space<vmem>>, vector<1x4x128xf32>
      %36 = vector.shape_cast %35 : vector<1x4x128xf32> to vector<4x128xf32>
      %37 = arith.truncf %36 : vector<4x128xf32> to vector<4x128xbf16>
      %c0_24 = arith.constant 0 : index
      %c0_25 = arith.constant 0 : index
      %38 = vector.load %arg5[%c0_24, %c0_25] : memref<4x128xbf16, #tpu.memory_space<vmem>>, vector<4x128xbf16>
      %cst_26 = arith.constant dense<0.000000e+00> : vector<128x128xf32>
      %39 = tpu.matmul %37, %38, %cst_26 {dimension_numbers = #tpu.dot_dimension_numbers<[0], [0], [1], [1], [0, 1, 1, 1], [], []>} : vector<4x128xbf16>, vector<4x128xbf16>, vector<128x128xf32> -> vector<128x128xf32>
      %c0_27 = arith.constant 0 : index
      %c0_28 = arith.constant 0 : index
      %40 = vector.load %arg6[%c0_27, %c0_28] : memref<1x128xf32, #tpu.memory_space<vmem>>, vector<1x128xf32>
      %41 = vector.broadcast %40 : vector<1x128xf32> to vector<128x128xf32>
      %42 = arith.addf %39, %41 : vector<128x128xf32>
      %43 = arith.truncf %42 : vector<128x128xf32> to vector<128x128xbf16>
      %c0_29 = arith.constant 0 : index
      %c0_30 = arith.constant 0 : index
      %44 = vector.load %arg10[%c0_29, %c0_30] : memref<128x128xbf16, #tpu.memory_space<vmem>>, vector<128x128xbf16>
      tpu.vector_store %arg10[%c0_29, %c0_30], %43 {strides = array<i32>} : memref<128x128xbf16, #tpu.memory_space<vmem>>, vector<128x128xbf16>,
      %cst_31 = arith.constant 0xFF800000 : f32
      %45 = vector.broadcast %cst_31 : f32 to vector<128x1xf32>
      %c0_32 = arith.constant 0 : index
      %c0_33 = arith.constant 0 : index
      %46 = vector.load %arg11[%c0_32, %c0_33] : memref<128x1xf32, #tpu.memory_space<vmem>>, vector<128x1xf32>
      tpu.vector_store %arg11[%c0_32, %c0_33], %45 {strides = array<i32>} : memref<128x1xf32, #tpu.memory_space<vmem>>, vector<128x1xf32>,
      %cst_34 = arith.constant 0.000000e+00 : f32
      %47 = vector.broadcast %cst_34 : f32 to vector<128x1xf32>
      %c0_35 = arith.constant 0 : index
      %c0_36 = arith.constant 0 : index
      %48 = vector.load %arg12[%c0_35, %c0_36] : memref<128x1xf32, #tpu.memory_space<vmem>>, vector<128x1xf32>
      tpu.vector_store %arg12[%c0_35, %c0_36], %47 {strides = array<i32>} : memref<128x1xf32, #tpu.memory_space<vmem>>, vector<128x1xf32>,
      %cst_37 = arith.constant 0.000000e+00 : f32
      %49 = vector.broadcast %cst_37 : f32 to vector<128x128xf32>
      %c0_38 = arith.constant 0 : index
      %c0_39 = arith.constant 0 : index
      %50 = vector.load %arg13[%c0_38, %c0_39] : memref<128x128xf32, #tpu.memory_space<vmem>>, vector<128x128xf32>
      tpu.vector_store %arg13[%c0_38, %c0_39], %49 {strides = array<i32>} : memref<128x128xf32, #tpu.memory_space<vmem>>, vector<128x128xf32>,
    } else {
    }
    %c0 = arith.constant 0 : index
    %c0_1 = arith.constant 0 : index
    %c0_2 = arith.constant 0 : index
    %3 = vector.load %arg4[%c0, %c0_1, %c0_2] : memref<1x256x128xbf16, #tpu.memory_space<vmem>>, vector<1x256x128xbf16>
    %4 = vector.shape_cast %3 : vector<1x256x128xbf16> to vector<256x128xbf16>
    %5 = vector.extract_strided_slice %4 {offsets = [0, 0], sizes = [128, 128], strides = [1, 1]} : vector<256x128xbf16> to vector<128x128xbf16>
    %6 = vector.extract_strided_slice %4 {offsets = [128, 0], sizes = [128, 128], strides = [1, 1]} : vector<256x128xbf16> to vector<128x128xbf16>
    %c0_3 = arith.constant 0 : index
    %c0_4 = arith.constant 0 : index
    %7 = vector.load %arg10[%c0_3, %c0_4] : memref<128x128xbf16, #tpu.memory_space<vmem>>, vector<128x128xbf16>
    %cst = arith.constant dense<0.000000e+00> : vector<128x128xf32>
    %8 = tpu.matmul %7, %5, %cst {dimension_numbers = #tpu.dot_dimension_numbers<[1], [0], [0], [1], [0, 0, 1, 1], [], []>} : vector<128x128xbf16>, vector<128x128xbf16>, vector<128x128xf32> -> vector<128x128xf32>
    %c0_5 = arith.constant 0 : index
    %c0_6 = arith.constant 0 : index
    %9 = vector.load %arg11[%c0_5, %c0_6] : memref<128x1xf32, #tpu.memory_space<vmem>>, vector<128x1xf32>
    %cst_7 = arith.constant dense<0xFF800000> : vector<128xf32>
    %10 = vector.multi_reduction <maximumf>, %8, %cst_7 [1] : vector<128x128xf32> to vector<128xf32>
    %11 = vector.shape_cast %10 : vector<128xf32> to vector<128x1xf32>
    %12 = arith.maximumf %9, %11 : vector<128x1xf32>
    %13 = arith.subf %9, %12 : vector<128x1xf32>
    %14 = math.exp %13 : vector<128x1xf32>
    %15 = vector.broadcast %12 : vector<128x1xf32> to vector<128x128xf32>
    %16 = arith.subf %8, %15 : vector<128x128xf32>
    %17 = math.exp %16 : vector<128x128xf32>
    %cst_8 = arith.constant dense<0.000000e+00> : vector<128xf32>
    %18 = vector.multi_reduction <add>, %17, %cst_8 [1] : vector<128x128xf32> to vector<128xf32>
    %19 = vector.shape_cast %18 : vector<128xf32> to vector<128x1xf32>
    %c0_9 = arith.constant 0 : index
    %c0_10 = arith.constant 0 : index
    %20 = vector.load %arg12[%c0_9, %c0_10] : memref<128x1xf32, #tpu.memory_space<vmem>>, vector<128x1xf32>
    %21 = arith.mulf %14, %20 : vector<128x1xf32>
    %22 = arith.addf %21, %19 : vector<128x1xf32>
    %c0_11 = arith.constant 0 : index
    %c0_12 = arith.constant 0 : index
    %23 = vector.load %arg12[%c0_11, %c0_12] : memref<128x1xf32, #tpu.memory_space<vmem>>, vector<128x1xf32>
    tpu.vector_store %arg12[%c0_11, %c0_12], %22 {strides = array<i32>} : memref<128x1xf32, #tpu.memory_space<vmem>>, vector<128x1xf32>,
    %24 = arith.truncf %17 : vector<128x128xf32> to vector<128x128xbf16>
    %cst_13 = arith.constant dense<0.000000e+00> : vector<128x128xf32>
    %25 = tpu.matmul %24, %6, %cst_13 {dimension_numbers = #tpu.dot_dimension_numbers<[1], [1], [0], [0], [0, 0, 1, 0], [], []>} : vector<128x128xbf16>, vector<128x128xbf16>, vector<128x128xf32> -> vector<128x128xf32>
    %c0_14 = arith.constant 0 : index
    %c0_15 = arith.constant 0 : index
    %26 = vector.load %arg13[%c0_14, %c0_15] : memref<128x128xf32, #tpu.memory_space<vmem>>, vector<128x128xf32>
    %27 = vector.broadcast %14 : vector<128x1xf32> to vector<128x128xf32>
    %28 = arith.mulf %27, %26 : vector<128x128xf32>
    %29 = arith.addf %28, %25 : vector<128x128xf32>
    %c0_16 = arith.constant 0 : index
    %c0_17 = arith.constant 0 : index
    %30 = vector.load %arg13[%c0_16, %c0_17] : memref<128x128xf32, #tpu.memory_space<vmem>>, vector<128x128xf32>
    tpu.vector_store %arg13[%c0_16, %c0_17], %29 {strides = array<i32>} : memref<128x128xf32, #tpu.memory_space<vmem>>, vector<128x128xf32>,
    %c0_18 = arith.constant 0 : index
    %c0_19 = arith.constant 0 : index
    %31 = vector.load %arg11[%c0_18, %c0_19] : memref<128x1xf32, #tpu.memory_space<vmem>>, vector<128x1xf32>
    tpu.vector_store %arg11[%c0_18, %c0_19], %12 {strides = array<i32>} : memref<128x1xf32, #tpu.memory_space<vmem>>, vector<128x1xf32>,
    %c1_i32 = arith.constant 1 : i32
    %32 = arith.cmpi eq, %arg2, %c1_i32 : i32
    %33 = arith.extui %32 : i1 to i32
    %c0_i32_20 = arith.constant 0 : i32
    %34 = arith.cmpi ne, %33, %c0_i32_20 : i32
    scf.if %34 {
      %c0_21 = arith.constant 0 : index
      %c0_22 = arith.constant 0 : index
      %35 = vector.load %arg12[%c0_21, %c0_22] : memref<128x1xf32, #tpu.memory_space<vmem>>, vector<128x1xf32>
      %36 = tpu.reciprocal %35 {approx = true} : vector<128x1xf32> -> vector<128x1xf32>
      %c0_23 = arith.constant 0 : index
      %c0_24 = arith.constant 0 : index
      %37 = vector.load %arg13[%c0_23, %c0_24] : memref<128x128xf32, #tpu.memory_space<vmem>>, vector<128x128xf32>
      %38 = vector.broadcast %36 : vector<128x1xf32> to vector<128x128xf32>
      %39 = arith.mulf %37, %38 : vector<128x128xf32>
      %40 = arith.truncf %39 : vector<128x128xf32> to vector<128x128xbf16>
      %c0_25 = arith.constant 0 : index
      %c0_26 = arith.constant 0 : index
      %41 = vector.load %arg7[%c0_25, %c0_26] : memref<4x128xbf16, #tpu.memory_space<vmem>>, vector<4x128xbf16>
      %cst_27 = arith.constant dense<0.000000e+00> : vector<4x128xf32>
      %42 = tpu.matmul %41, %40, %cst_27 {dimension_numbers = #tpu.dot_dimension_numbers<[1], [1], [0], [0], [0, 0, 1, 0], [], []>} : vector<4x128xbf16>, vector<128x128xbf16>, vector<4x128xf32> -> vector<4x128xf32>
      %c0_28 = arith.constant 0 : index
      %c0_29 = arith.constant 0 : index
      %43 = vector.load %arg8[%c0_28, %c0_29] : memref<4x1xf32, #tpu.memory_space<vmem>>, vector<4x1xf32>
      %44 = vector.broadcast %43 : vector<4x1xf32> to vector<4x128xf32>
      %45 = arith.addf %42, %44 : vector<4x128xf32>
      %c0_30 = arith.constant 0 : index
      %c0_31 = arith.constant 0 : index
      %c0_32 = arith.constant 0 : index
      %46 = vector.load %arg3[%c0_30, %c0_31, %c0_32] : memref<1x4x128xf32, #tpu.memory_space<vmem>>, vector<1x4x128xf32>
      %47 = vector.shape_cast %46 : vector<1x4x128xf32> to vector<4x128xf32>
      %48 = arith.addf %45, %47 : vector<4x128xf32>
      %c0_33 = arith.constant 0 : index
      %c0_34 = arith.constant 0 : index
      %c0_35 = arith.constant 0 : index
      %49 = vector.load %arg9[%c0_33, %c0_34, %c0_35] : memref<1x4x128xf32, #tpu.memory_space<vmem>>, vector<1x4x128xf32>
      %50 = vector.shape_cast %49 : vector<1x4x128xf32> to vector<4x128xf32>
      %51 = vector.shape_cast %48 : vector<4x128xf32> to vector<1x4x128xf32>
      tpu.vector_store %arg9[%c0_33, %c0_34, %c0_35], %51 {strides = array<i32>} : memref<1x4x128xf32, #tpu.memory_space<vmem>>, vector<1x4x128xf32>,
    } else {
    }
    return
  }
  func.func @transform_0(%arg0: i32, %arg1: i32, %arg2: i32) -> (i32, i32, i32) {
    %c0_i32 = arith.constant 0 : i32
    %c0_i32_0 = arith.constant 0 : i32
    return %arg0, %c0_i32, %arg1 : i32, i32, i32
  }
  func.func @transform_1(%arg0: i32, %arg1: i32, %arg2: i32) -> (i32, i32, i32) {
    %c0_i32 = arith.constant 0 : i32
    %c0_i32_0 = arith.constant 0 : i32
    return %arg0, %c0_i32, %arg2 : i32, i32, i32
  }
  func.func @transform_2(%arg0: i32, %arg1: i32, %arg2: i32) -> (i32, i32) {
    %c0_i32 = arith.constant 0 : i32
    %c0_i32_0 = arith.constant 0 : i32
    %c0_i32_1 = arith.constant 0 : i32
    return %c0_i32, %c0_i32_0 : i32, i32
  }
  func.func @transform_3(%arg0: i32, %arg1: i32, %arg2: i32) -> (i32, i32) {
    %c0_i32 = arith.constant 0 : i32
    %c0_i32_0 = arith.constant 0 : i32
    %c0_i32_1 = arith.constant 0 : i32
    return %c0_i32, %c0_i32_0 : i32, i32
  }
  func.func @transform_4(%arg0: i32, %arg1: i32, %arg2: i32) -> (i32, i32) {
    %c0_i32 = arith.constant 0 : i32
    %c0_i32_0 = arith.constant 0 : i32
    %c0_i32_1 = arith.constant 0 : i32
    return %c0_i32, %c0_i32_0 : i32, i32
  }
  func.func @transform_5(%arg0: i32, %arg1: i32, %arg2: i32) -> (i32, i32) {
    %c0_i32 = arith.constant 0 : i32
    %c0_i32_0 = arith.constant 0 : i32
    %c0_i32_1 = arith.constant 0 : i32
    return %c0_i32, %c0_i32_0 : i32, i32
  }
  func.func @transform_6(%arg0: i32, %arg1: i32, %arg2: i32) -> (i32, i32, i32) {
    %c0_i32 = arith.constant 0 : i32
    %c0_i32_0 = arith.constant 0 : i32
    return %arg0, %c0_i32, %arg1 : i32, i32, i32
  }
}

</mosaic_0001>

<llo_original>
// kernel: tpu_custom_call.1
$region0: #{tpu_custom_call.1}
  #allocation0 [shape = 'u32[]', space=smem, size = 0x4, offset = 0x4, fixed_abs, tag = 'smem constant byte address 0x4 - core index']
  #allocation1 [shape = 'u32[144,128]{1,0:T(1,128)}', space=vmem, size = 0x12000, scoped, tag = 'internal scratch']
  #allocation2 [shape = 'bf16[128,128]{1,0:T(8,128)(2,1)}', space=vmem, size = 0x8000, scoped, tag = 'scratch operand']
  #allocation3 [shape = 'f32[128,1]{1,0:T(8,128)}', space=vmem, size = 0x10000, scoped, tag = 'scratch operand']
  #allocation4 [shape = 'f32[128,1]{1,0:T(8,128)}', space=vmem, size = 0x10000, scoped, tag = 'scratch operand']
  #allocation5 [shape = 'f32[128,128]{1,0:T(8,128)}', space=vmem, size = 0x10000, scoped, tag = 'scratch operand']
  %s0 = inlined_call_operand.hbm [shape: f32[2,4,256], index: 0, kind: input, shape index: {}]
  %s1 = inlined_call_operand.hbm [shape: bf16[2,256,256], index: 1, kind: input, shape index: {}]
  %s2 = inlined_call_operand.vmem [shape: bf16[4,128], index: 2, kind: input, shape index: {}]
  %s3 = inlined_call_operand.vmem [shape: f32[1,128], index: 3, kind: input, shape index: {}]
  %s4 = inlined_call_operand.vmem [shape: bf16[4,128], index: 4, kind: input, shape index: {}]
  %s5 = inlined_call_operand.vmem [shape: f32[4,1], index: 5, kind: input, shape index: {}]
  %s6 = inlined_call_operand.hbm [shape: f32[2,4,256], index: 6, kind: output, shape index: {}]
  %s7 = sld [smem:[#allocation0]]
  $region73: #{tpu_custom_call.1} parent=0
    _
  %s9 = ssub.s32 1, %s7
  %s10 = scalar_select 0, %s9, %s7
  $region1: #{tpu_custom_call.1} parent=0
    #allocation6 [shape = 'u8[4096]{0}', space=vmem, size = 0x1000, scoped, tag = 'input window, operand 0']
    #allocation7 [shape = 's32[2]{0}', space=sflag, size = 0x8, scoped, tag = 'scoped memory for tpu_custom_call.1']
    #allocation8 [shape = 's32[2]{0}', space=sflag, size = 0x8, scoped, tag = 'scoped memory for tpu_custom_call.1']
    #allocation9 [shape = 'u8[131072]{0}', space=vmem, size = 0x20000, scoped, tag = 'input window, operand 1']
    #allocation10 [shape = 's32[2]{0}', space=sflag, size = 0x8, scoped, tag = 'scoped memory for tpu_custom_call.1']
    #allocation11 [shape = 'u8[4096]{0}', space=vmem, size = 0x1000, scoped, tag = 'output window, operand 0']
    %11 = vsyncpa [#allocation7], 0
    %s12 = scalar_lea.sflag [#allocation7], 1
    %13 = vsyncpa %s12, 0
    %14 = vsyncpa [#allocation10], 0
    %s15 = scalar_lea.sflag [#allocation10], 1
    %16 = vsyncpa %s15, 0
    %17 = vsyncpa [#allocation8], 0
    %s18 = scalar_lea.sflag [#allocation8], 1
    %19 = vsyncpa %s18, 0
    loop: start=0, step=1, limit=10
    $region2: #{tpu_custom_call.1} parent=1 // loop_pre_header
      _
    $region3: #{tpu_custom_call.1} parent=1 // loop_header
      %s21 = sphi 0, %s25
      %p22 = scmp.ge.s32.totalorder %s21, 10
      %s28 = sphi 0, %s47
      %s29 = sphi 0, %s43
      %s30 = sphi 0, %s39
      %s31 = sphi 0, %s28
      %s32 = sphi 0, %s29
      %s33 = sphi 0, %s30
      %s34 = sphi 0, %s31
      %s35 = sphi 0, %s32
      %s36 = sphi 0, %s33
      %s52 = sphi 0, %s54
      %s55 = sphi 0, %s52
      %s56 = sphi 0, %s55
      %s72 = sphi 0, %s56
      %s80 = sphi 0, %s82
      %s83 = sphi 0, %s80
      %s84 = sphi 0, %s83
      %s100 = sphi 0, %s84
      %s104 = sphi 0, %s104
      %s106 = sphi 0, %s104
      %s107 = sphi 0, %s106
      %s121 = sphi 0, %s107
      %s125 = sphi 0, %s125
      %s127 = sphi 0, %s125
      %s128 = sphi 0, %s127
      %s142 = sphi 0, %s128
      %s146 = sphi 0, %s146
      %s148 = sphi 0, %s146
      %s149 = sphi 0, %s148
      %s163 = sphi 0, %s149
      %s167 = sphi 0, %s167
      %s169 = sphi 0, %s167
      %s170 = sphi 0, %s169
      %s184 = sphi 0, %s170
      %s192 = sphi 0, %s194
      %s195 = sphi 0, %s192
      %s196 = sphi 0, %s195
      %s212 = sphi 0, %s196
    $region4: #{tpu_custom_call.1} parent=1 // loop_header_branch
      %24 = sbr.rel (%p22) target = $region8
    $region5: #{tpu_custom_call.1} parent=1 // loop_body
      %s26 = ssub.s32 %s21, 1
      %s27 = ssub.s32 %s21, 2
      %s37 = sadd.s32 1, %s30
      %p38 = scmp.ge.s32.totalorder %s37, 2
      %s39 = scalar_select %p38, 0, %s37
      %s40 = sadd.s32 1, %s29
      %s41 = scalar_select %p38, %s40, %s29
      %p42 = scmp.ge.s32.totalorder %s41, 2
      %s43 = scalar_select %p42, 0, %s41
      %s44 = sadd.s32 1, %s28
      %s45 = scalar_select %p42, %s44, %s28
      %p46 = scmp.ge.s32.totalorder %s45, 2
      %s47 = scalar_select %p46, 0, %s45
      %s48 = ssub.s32 %s28, %s47
      %s49 = ssub.s32 %s29, %s43
      %s50 = sor.u32 %s48, %s49
      %p51 = scmp.eq.s32.totalorder %s50, 0
      %s53 = sadd.s32 %s52, 1
      %s54 = scalar_select %p51, %s52, %s53
      %p57 = pneg %p51
      %p58 = scmp.eq.s32.totalorder %s21, 7
      %p59 = por %p57, %p58
      %p60 = scmp.ne.s32.totalorder %s52, %s55
      %p61 = scmp.eq.s32.totalorder %s21, 0
      %p62 = por %p60, %p61
      %p63 = scmp.ne.s32.totalorder %s52, %s55
      %p64 = scmp.eq.s32.totalorder %s26, 7
      %p65 = por %p63, %p64
      %p66 = scmp.ne.s32.totalorder %s55, %s56
      %p67 = scmp.eq.s32.totalorder %s26, 0
      %p68 = por %p66, %p67
      %p69 = scmp.ne.s32.totalorder %s55, %s56
      %p70 = scmp.eq.s32.totalorder %s27, 7
      %p71 = por %p69, %p70
      %p73 = scmp.ne.s32.totalorder %s56, %s72
      %p74 = scmp.eq.s32.totalorder %s27, 0
      %p75 = por %p73, %p74
      %s76 = ssub.s32 %s28, %s47
      %s77 = ssub.s32 %s30, %s39
      %s78 = sor.u32 %s76, %s77
      %p79 = scmp.eq.s32.totalorder %s78, 0
      %s81 = sadd.s32 %s80, 1
      %s82 = scalar_select %p79, %s80, %s81
      %p85 = pneg %p79
      %p86 = scmp.eq.s32.totalorder %s21, 7
      %p87 = por %p85, %p86
      %p88 = scmp.ne.s32.totalorder %s80, %s83
      %p89 = scmp.eq.s32.totalorder %s21, 0
      %p90 = por %p88, %p89
      %p91 = scmp.ne.s32.totalorder %s80, %s83
      %p92 = scmp.eq.s32.totalorder %s26, 7
      %p93 = por %p91, %p92
      %p94 = scmp.ne.s32.totalorder %s83, %s84
      %p95 = scmp.eq.s32.totalorder %s26, 0
      %p96 = por %p94, %p95
      %p97 = scmp.ne.s32.totalorder %s83, %s84
      %p98 = scmp.eq.s32.totalorder %s27, 7
      %p99 = por %p97, %p98
      %p101 = scmp.ne.s32.totalorder %s84, %s100
      %p102 = scmp.eq.s32.totalorder %s27, 0
      %p103 = por %p101, %p102
      %s105 = sadd.s32 %s104, 1
      %p108 = scmp.eq.s32.totalorder %s21, 7
      %p109 = scmp.ne.s32.totalorder %s104, %s106
      %p110 = scmp.eq.s32.totalorder %s21, 0
      %p111 = por %p109, %p110
      %p112 = scmp.ne.s32.totalorder %s104, %s106
      %p113 = scmp.eq.s32.totalorder %s26, 7
      %p114 = por %p112, %p113
      %p115 = scmp.ne.s32.totalorder %s106, %s107
      %p116 = scmp.eq.s32.totalorder %s26, 0
      %p117 = por %p115, %p116
      %p118 = scmp.ne.s32.totalorder %s106, %s107
      %p119 = scmp.eq.s32.totalorder %s27, 7
      %p120 = por %p118, %p119
      %p122 = scmp.ne.s32.totalorder %s107, %s121
      %p123 = scmp.eq.s32.totalorder %s27, 0
      %p124 = por %p122, %p123
      %s126 = sadd.s32 %s125, 1
      %p129 = scmp.eq.s32.totalorder %s21, 7
      %p130 = scmp.ne.s32.totalorder %s125, %s127
      %p131 = scmp.eq.s32.totalorder %s21, 0
      %p132 = por %p130, %p131
      %p133 = scmp.ne.s32.totalorder %s125, %s127
      %p134 = scmp.eq.s32.totalorder %s26, 7
      %p135 = por %p133, %p134
      %p136 = scmp.ne.s32.totalorder %s127, %s128
      %p137 = scmp.eq.s32.totalorder %s26, 0
      %p138 = por %p136, %p137
      %p139 = scmp.ne.s32.totalorder %s127, %s128
      %p140 = scmp.eq.s32.totalorder %s27, 7
      %p141 = por %p139, %p140
      %p143 = scmp.ne.s32.totalorder %s128, %s142
      %p144 = scmp.eq.s32.totalorder %s27, 0
      %p145 = por %p143, %p144
      %s147 = sadd.s32 %s146, 1
      %p150 = scmp.eq.s32.totalorder %s21, 7
      %p151 = scmp.ne.s32.totalorder %s146, %s148
      %p152 = scmp.eq.s32.totalorder %s21, 0
      %p153 = por %p151, %p152
      %p154 = scmp.ne.s32.totalorder %s146, %s148
      %p155 = scmp.eq.s32.totalorder %s26, 7
      %p156 = por %p154, %p155
      %p157 = scmp.ne.s32.totalorder %s148, %s149
      %p158 = scmp.eq.s32.totalorder %s26, 0
      %p159 = por %p157, %p158
      %p160 = scmp.ne.s32.totalorder %s148, %s149
      %p161 = scmp.eq.s32.totalorder %s27, 7
      %p162 = por %p160, %p161
      %p164 = scmp.ne.s32.totalorder %s149, %s163
      %p165 = scmp.eq.s32.totalorder %s27, 0
      %p166 = por %p164, %p165
      %s168 = sadd.s32 %s167, 1
      %p171 = scmp.eq.s32.totalorder %s21, 7
      %p172 = scmp.ne.s32.totalorder %s167, %s169
      %p173 = scmp.eq.s32.totalorder %s21, 0
      %p174 = por %p172, %p173
      %p175 = scmp.ne.s32.totalorder %s167, %s169
      %p176 = scmp.eq.s32.totalorder %s26, 7
      %p177 = por %p175, %p176
      %p178 = scmp.ne.s32.totalorder %s169, %s170
      %p179 = scmp.eq.s32.totalorder %s26, 0
      %p180 = por %p178, %p179
      %p181 = scmp.ne.s32.totalorder %s169, %s170
      %p182 = scmp.eq.s32.totalorder %s27, 7
      %p183 = por %p181, %p182
      %p185 = scmp.ne.s32.totalorder %s170, %s184
      %p186 = scmp.eq.s32.totalorder %s27, 0
      %p187 = por %p185, %p186
      %s188 = ssub.s32 %s28, %s47
      %s189 = ssub.s32 %s29, %s43
      %s190 = sor.u32 %s188, %s189
      %p191 = scmp.eq.s32.totalorder %s190, 0
      %s193 = sadd.s32 %s192, 1
      %s194 = scalar_select %p191, %s192, %s193
      %p197 = pneg %p191
      %p198 = scmp.eq.s32.totalorder %s21, 7
      %p199 = por %p197, %p198
      %p200 = scmp.ne.s32.totalorder %s192, %s195
      %p201 = scmp.eq.s32.totalorder %s21, 0
      %p202 = por %p200, %p201
      %p203 = scmp.ne.s32.totalorder %s192, %s195
      %p204 = scmp.eq.s32.totalorder %s26, 7
      %p205 = por %p203, %p204
      %p206 = scmp.ne.s32.totalorder %s195, %s196
      %p207 = scmp.eq.s32.totalorder %s26, 0
      %p208 = por %p206, %p207
      %p209 = scmp.ne.s32.totalorder %s195, %s196
      %p210 = scmp.eq.s32.totalorder %s27, 7
      %p211 = por %p209, %p210
      %p213 = scmp.ne.s32.totalorder %s196, %s212
      %p214 = scmp.eq.s32.totalorder %s27, 0
      %p215 = por %p213, %p214
      %p216 = scmp.le.s32.totalorder 1, %s21
      %p217 = scmp.lt.s32.totalorder %s21, 9
      %p218 = pnand %p216, %p217
      %p219 = pneg %p218
      // Predicated region
      $region9: #{tpu_custom_call.1} parent=5 // pred_check
        _
      $region10: #{tpu_custom_call.1} parent=5 // pred_check_branch
        %221 = sbr.rel (%p218) target = $region12
      $region11: #{tpu_custom_call.1} parent=5 // pred_region
        %s222 = ssub.s32 %s21, 1
        // Predicated region
        $region13: #{tpu_custom_call.1} parent=11 // pred_check
          %p223 = pneg %p117
        $region14: #{tpu_custom_call.1} parent=11 // pred_check_branch
          %225 = sbr.rel (%p223) target = $region16
        $region15: #{tpu_custom_call.1} parent=11 // pred_region
          _
        $region16: #{tpu_custom_call.1} parent=11 // pred_fallthru
          _
        // Predicated region
        $region17: #{tpu_custom_call.1} parent=11 // pred_check
          %p226 = pneg %p138
        $region18: #{tpu_custom_call.1} parent=11 // pred_check_branch
          %228 = sbr.rel (%p226) target = $region20
        $region19: #{tpu_custom_call.1} parent=11 // pred_region
          _
        $region20: #{tpu_custom_call.1} parent=11 // pred_fallthru
          _
        // Predicated region
        $region21: #{tpu_custom_call.1} parent=11 // pred_check
          %p229 = pneg %p159
        $region22: #{tpu_custom_call.1} parent=11 // pred_check_branch
          %231 = sbr.rel (%p229) target = $region24
        $region23: #{tpu_custom_call.1} parent=11 // pred_region
          _
        $region24: #{tpu_custom_call.1} parent=11 // pred_fallthru
          _
        // Predicated region
        $region25: #{tpu_custom_call.1} parent=11 // pred_check
          %p232 = pneg %p180
        $region26: #{tpu_custom_call.1} parent=11 // pred_check_branch
          %234 = sbr.rel (%p232) target = $region28
        $region27: #{tpu_custom_call.1} parent=11 // pred_region
          _
        $region28: #{tpu_custom_call.1} parent=11 // pred_fallthru
          _
      $region12: #{tpu_custom_call.1} parent=5 // pred_fallthru
        _
      %p235 = scmp.lt.s32.totalorder %s21, 8
      // Predicated region
      $region29: #{tpu_custom_call.1} parent=5 // pred_check
        %p236 = pneg %p235
      $region30: #{tpu_custom_call.1} parent=5 // pred_check_branch
        %238 = sbr.rel (%p236) target = $region32
      $region31: #{tpu_custom_call.1} parent=5 // pred_region
        // Predicated region
        $region33: #{tpu_custom_call.1} parent=31 // pred_check
          %p239 = pneg %p62
        $region34: #{tpu_custom_call.1} parent=31 // pred_check_branch
          %241 = sbr.rel (%p239) target = $region36
        $region35: #{tpu_custom_call.1} parent=31 // pred_region
          %s242 = sand.u32 %s52, 1
          %s243 = scalar_lea.sflag [#allocation7], %s242
          %s244 = sand.u32 %s52, 1
          %s245 = smul.addr %s244, 4
          %s246 = scalar_lea.vmem [#allocation6], %s245
          %s248 = ssub.s32 64, 64
          %249 = vsyncadd %s243, %s248
          %s250 = smul.addr %s28, 2
          %s251 = sadd.s32 %s29, %s250
          %s252 = smul.addr %s251, 64
          %s253 = scalar_lea.hbm %s0, %s252
          %s255 = sshll.u32 %s246, 4
          %s256 = int_to_ptr.vmem [resolvable:$true] %s255
          %258 = dma.hbm_to_vmem [thread:$0]  %s253, 64, %s256, %s243
        $region36: #{tpu_custom_call.1} parent=31 // pred_fallthru
          _
        // Predicated region
        $region37: #{tpu_custom_call.1} parent=31 // pred_check
          %p259 = pneg %p90
        $region38: #{tpu_custom_call.1} parent=31 // pred_check_branch
          %261 = sbr.rel (%p259) target = $region40
        $region39: #{tpu_custom_call.1} parent=31 // pred_region
          %s262 = sand.u32 %s80, 1
          %s263 = scalar_lea.sflag [#allocation10], %s262
          %s264 = sand.u32 %s80, 1
          %s265 = smul.addr %s264, 128
          %s266 = scalar_lea.vmem [#allocation9], %s265
          %s268 = ssub.s32 2048, 2048
          %269 = vsyncadd %s263, %s268
          %s270 = smul.addr %s28, 64
          %s271 = sadd.s32 %s30, %s270
          %s272 = smul.addr %s271, 64
          %s273 = scalar_lea.hbm %s1, %s272
          %s274 = sshll.u32 %s266, 4
          %s275 = int_to_ptr.vmem [resolvable:$true] %s274
          %280 = dma.hbm_to_vmem [thread:$0]  %s273, 2048, %s275, %s263, 128, 64, 4
        $region40: #{tpu_custom_call.1} parent=31 // pred_fallthru
          _
      $region32: #{tpu_custom_call.1} parent=5 // pred_fallthru
        _
      %p281 = scmp.le.s32.totalorder 1, %s21
      %p282 = scmp.lt.s32.totalorder %s21, 9
      %p283 = pnand %p281, %p282
      %p284 = pneg %p283
      // Predicated region
      $region41: #{tpu_custom_call.1} parent=5 // pred_check
        _
      $region42: #{tpu_custom_call.1} parent=5 // pred_check_branch
        %286 = sbr.rel (%p283) target = $region44
      $region43: #{tpu_custom_call.1} parent=5 // pred_region
        %s287 = ssub.s32 %s21, 1
        %s288 = sand.u32 %s55, 1
        %s289 = scalar_lea.sflag [#allocation7], %s288
        %s290 = sand.u32 %s55, 1
        %s291 = smul.addr %s290, 4
        %s292 = scalar_lea.vmem [#allocation6], %s291
        // Predicated region
        $region45: #{tpu_custom_call.1} parent=43 // pred_check
          %p293 = pneg %p68
        $region46: #{tpu_custom_call.1} parent=43 // pred_check_branch
          %295 = sbr.rel (%p293) target = $region48
        $region47: #{tpu_custom_call.1} parent=43 // pred_region
          %296 = dma.done %s289, 64
        $region48: #{tpu_custom_call.1} parent=43 // pred_fallthru
          _
        %s297 = sand.u32 %s83, 1
        %s298 = scalar_lea.sflag [#allocation10], %s297
        %s299 = sand.u32 %s83, 1
        %s300 = smul.addr %s299, 128
        %s301 = scalar_lea.vmem [#allocation9], %s300
        // Predicated region
        $region49: #{tpu_custom_call.1} parent=43 // pred_check
          %p302 = pneg %p96
        $region50: #{tpu_custom_call.1} parent=43 // pred_check_branch
          %304 = sbr.rel (%p302) target = $region52
        $region51: #{tpu_custom_call.1} parent=43 // pred_region
          %305 = dma.done %s298, 2048
        $region52: #{tpu_custom_call.1} parent=43 // pred_fallthru
          _
        %s306 = sand.u32 %s55, 1
        %s307 = scalar_lea.sflag [#allocation7], %s306
        %s308 = sand.u32 %s55, 1
        %s309 = smul.addr %s308, 4
        %s310 = scalar_lea.vmem [#allocation6], %s309
        %p311 = pneg %p68
        %p312 = pneg %p65
        %s313 = sand.u32 %s83, 1
        %s314 = scalar_lea.sflag [#allocation10], %s313
        %s315 = sand.u32 %s83, 1
        %s316 = smul.addr %s315, 128
        %s317 = scalar_lea.vmem [#allocation9], %s316
        %p318 = pneg %p96
        %p319 = pneg %p93
        %p320 = pneg %p117
        %p321 = pneg %p114
        %p322 = pneg %p138
        %p323 = pneg %p135
        %p324 = pneg %p159
        %p325 = pneg %p156
        %p326 = pneg %p180
        %p327 = pneg %p177
        %p328 = pneg %p208
        %p329 = pneg %p205
        %s330 = sand.u32 %s195, 1
        %s331 = scalar_lea.sflag [#allocation8], %s330
        %s332 = sand.u32 %s195, 1
        %s333 = smul.addr %s332, 4
        %s334 = scalar_lea.vmem [#allocation11], %s333
        %p336 = scmp.eq.s32.totalorder %s33, 0
        // Predicated region
        $region53: #{tpu_custom_call.1} parent=43 // pred_check
          %p337 = pneg %p336
        $region54: #{tpu_custom_call.1} parent=43 // pred_check_branch
          %339 = sbr.rel (%p337) target = $region56
        $region55: #{tpu_custom_call.1} parent=43 // pred_region
          %v340 = vld [vmem:[%s292] sm:$0xf]
          %v341 = vpack.c.bf16 %v340, %v340
          %v342 = vld [vmem:[%s2] sm:$0x3]
          %v343 = vld [vmem:[%s3] sm:$0x1]
          %v345 = vlaneseq
          %v346 = vshrl.u32 %v345, 7
          %v347 = vsub.s32 0, %v346
          %v348 = vrot.slane %v343, %v347
          %350 = vxpose.xlu0.c.b16.start [1/8] %v341, 128
          %351 = vxpose.xlu0.c.b16.cont [2/8] 0, 128
          %352 = vxpose.xlu0.c.b16.cont [3/8] 0, 128
          %353 = vxpose.xlu0.c.b16.cont [4/8] 0, 128
          %354 = vxpose.xlu0.c.b16.cont [5/8] 0, 128
          %355 = vxpose.xlu0.c.b16.cont [6/8] 0, 128
          %356 = vxpose.xlu0.c.b16.cont [7/8] 0, 128
          %357 = vxpose.xlu0.c.b16.end [8/8] 0, 128
          %v358 = vpop.trf.xlu0
          %v359 = vpop.trf.xlu0
          %v360 = vpop.trf.xlu0
          %v361 = vpop.trf.xlu0
          %v362 = vpop.trf.xlu0
          %v363 = vpop.trf.xlu0
          %v364 = vpop.trf.xlu0
          %v365 = vpop.trf.xlu0
          %vm366 = vcmask 31744
          %v368 = vsel %vm366, %v358, 0
          %v371 = vsel %vm366, %v359, 0
          %v374 = vsel %vm366, %v360, 0
          %v377 = vsel %vm366, %v361, 0
          %v380 = vsel %vm366, %v362, 0
          %v383 = vsel %vm366, %v363, 0
          %v386 = vsel %vm366, %v364, 0
          %v389 = vsel %vm366, %v365, 0
          %vm391 = vcmask 1041408
          %v393 = vsel %vm391, %v342, 0
          %395 = vmatprep.subr.bf16.mxu0 0
          %396 = vmatpush1.bf16.msra.mxu0 0
          %397 = vmatprep.subr.bf16.mxu0 0
          %398 = vmatpush1.bf16.msra.mxu0 0
          %399 = vmatprep.subr.bf16.mxu0 0
          %400 = vmatpush1.bf16.msra.mxu0 0
          %401 = vmatprep.subr.bf16.mxu0 0
          %402 = vmatpush1.bf16.msra.mxu0 0
          %403 = vmatprep.subr.bf16.mxu0 0
          %404 = vmatpush1.bf16.msra.mxu0 0
          %405 = vmatprep.subr.bf16.mxu0 0
          %406 = vmatpush1.bf16.msra.mxu0 0
          %407 = vmatprep.subr.bf16.mxu0 0
          %408 = vmatpush1.bf16.msra.mxu0 0
          %409 = vmatprep.subr.bf16.mxu0 0
          %410 = vmatpush1.bf16.msra.mxu0 %v393
          %411 = vmatprep.subr.bf16.mxu0 0
          %412 = vmatpush2.bf16.msra.mxu0 0
          %413 = vmatprep.subr.bf16.mxu0 0
          %414 = vmatpush2.bf16.msra.mxu0 0
          %415 = vmatprep.subr.bf16.mxu0 0
          %416 = vmatpush2.bf16.msra.mxu0 0
          %417 = vmatprep.subr.bf16.mxu0 0
          %418 = vmatpush2.bf16.msra.mxu0 0
          %419 = vmatprep.subr.bf16.mxu0 0
          %420 = vmatpush2.bf16.msra.mxu0 0
          %421 = vmatprep.subr.bf16.mxu0 0
          %422 = vmatpush2.bf16.msra.mxu0 0
          %423 = vmatprep.subr.bf16.mxu0 0
          %424 = vmatpush2.bf16.msra.mxu0 0
          %425 = vmatprep.subr.bf16.mxu0 0
          %426 = vmatpush2.bf16.msra.mxu0 0
          %427 = vmatprep.mubr.bf16.mxu0 0
          %428 = vmatmul.mubr.bf16.gmra.mxu0 %v368
          %v429 = vpop.f32.mrf.mxu0
          %v430 = vadd.f32 %v348, %v429
          %v431 = vpop.f32.mrf.mxu0
          %v432 = vpop.f32.mrf.mxu0
          %v433 = vadd.f32 %v348, %v432
          %v434 = vpop.f32.mrf.mxu0
          %435 = vmatprep.mubr.bf16.mxu0 0
          %436 = vmatmul.mubr.bf16.gmra.mxu0 %v371
          %v437 = vpop.f32.mrf.mxu0
          %v438 = vadd.f32 %v348, %v437
          %v439 = vpop.f32.mrf.mxu0
          %v440 = vpop.f32.mrf.mxu0
          %v441 = vadd.f32 %v348, %v440
          %v442 = vpop.f32.mrf.mxu0
          %443 = vmatprep.mubr.bf16.mxu0 0
          %444 = vmatmul.mubr.bf16.gmra.mxu0 %v374
          %v445 = vpop.f32.mrf.mxu0
          %v446 = vadd.f32 %v348, %v445
          %v447 = vpop.f32.mrf.mxu0
          %v448 = vpop.f32.mrf.mxu0
          %v449 = vadd.f32 %v348, %v448
          %v450 = vpop.f32.mrf.mxu0
          %451 = vmatprep.mubr.bf16.mxu0 0
          %452 = vmatmul.mubr.bf16.gmra.mxu0 %v377
          %v453 = vpop.f32.mrf.mxu0
          %v454 = vadd.f32 %v348, %v453
          %v455 = vpop.f32.mrf.mxu0
          %v456 = vpop.f32.mrf.mxu0
          %v457 = vadd.f32 %v348, %v456
          %v458 = vpop.f32.mrf.mxu0
          %459 = vmatprep.mubr.bf16.mxu0 0
          %460 = vmatmul.mubr.bf16.gmra.mxu0 %v380
          %v461 = vpop.f32.mrf.mxu0
          %v462 = vadd.f32 %v348, %v461
          %v463 = vpop.f32.mrf.mxu0
          %v464 = vpop.f32.mrf.mxu0
          %v465 = vadd.f32 %v348, %v464
          %v466 = vpop.f32.mrf.mxu0
          %467 = vmatprep.mubr.bf16.mxu0 0
          %468 = vmatmul.mubr.bf16.gmra.mxu0 %v383
          %v469 = vpop.f32.mrf.mxu0
          %v470 = vadd.f32 %v348, %v469
          %v471 = vpop.f32.mrf.mxu0
          %v472 = vpop.f32.mrf.mxu0
          %v473 = vadd.f32 %v348, %v472
          %v474 = vpop.f32.mrf.mxu0
          %475 = vmatprep.mubr.bf16.mxu0 0
          %476 = vmatmul.mubr.bf16.gmra.mxu0 %v386
          %v477 = vpop.f32.mrf.mxu0
          %v478 = vadd.f32 %v348, %v477
          %v479 = vpop.f32.mrf.mxu0
          %v480 = vpop.f32.mrf.mxu0
          %v481 = vadd.f32 %v348, %v480
          %v482 = vpop.f32.mrf.mxu0
          %483 = vmatprep.mubr.bf16.mxu0 0
          %484 = vmatmul.mubr.bf16.gmra.mxu0 %v389
          %v485 = vpop.f32.mrf.mxu0
          %v486 = vadd.f32 %v348, %v485
          %v487 = vpop.f32.mrf.mxu0
          %v488 = vpop.f32.mrf.mxu0
          %v489 = vadd.f32 %v348, %v488
          %v490 = vpop.f32.mrf.mxu0
          %491 = vdwg.mxu0
          %v492 = vpack.c.bf16 %v433, %v430
          %v493 = vpack.c.bf16 %v441, %v438
          %v494 = vpack.c.bf16 %v449, %v446
          %v495 = vpack.c.bf16 %v457, %v454
          %v496 = vpack.c.bf16 %v465, %v462
          %v497 = vpack.c.bf16 %v473, %v470
          %v498 = vpack.c.bf16 %v481, %v478
          %v499 = vpack.c.bf16 %v489, %v486
          %v508 = vunpack.c.l.b16 %v492
          %v509 = vunpack.c.h.b16 %v492
          %v510 = vunpack.c.l.b16 %v493
          %v511 = vunpack.c.h.b16 %v493
          %v512 = vunpack.c.l.b16 %v494
          %v513 = vunpack.c.h.b16 %v494
          %v514 = vunpack.c.l.b16 %v495
          %v515 = vunpack.c.h.b16 %v495
          %v516 = vunpack.c.l.b16 %v496
          %v517 = vunpack.c.h.b16 %v496
          %v518 = vunpack.c.l.b16 %v497
          %v519 = vunpack.c.h.b16 %v497
          %v520 = vunpack.c.l.b16 %v498
          %v521 = vunpack.c.h.b16 %v498
          %v522 = vunpack.c.l.b16 %v499
          %v523 = vunpack.c.h.b16 %v499
          %v524 = vpack.c.b16 %v508, %v508
          %v525 = vpack.c.b16 %v509, %v509
          %v526 = vpack.c.b16 %v510, %v510
          %v527 = vpack.c.b16 %v511, %v511
          %v528 = vpack.c.b16 %v512, %v512
          %v529 = vpack.c.b16 %v513, %v513
          %v530 = vpack.c.b16 %v514, %v514
          %v531 = vpack.c.b16 %v515, %v515
          %v532 = vpack.c.b16 %v516, %v516
          %v533 = vpack.c.b16 %v517, %v517
          %v534 = vpack.c.b16 %v518, %v518
          %v535 = vpack.c.b16 %v519, %v519
          %v536 = vpack.c.b16 %v520, %v520
          %v537 = vpack.c.b16 %v521, %v521
          %v538 = vpack.c.b16 %v522, %v522
          %v539 = vpack.c.b16 %v523, %v523
          %556 = vst [vmem:[#allocation2] sm:$0xf] %v524
          %557 = vst [vmem:[#allocation2 + $0x4] sm:$0xf] %v525
          %558 = vst [vmem:[#allocation2 + $0x8] sm:$0xf] %v526
          %559 = vst [vmem:[#allocation2 + $0xc] sm:$0xf] %v527
          %560 = vst [vmem:[#allocation2 + $0x10] sm:$0xf] %v528
          %561 = vst [vmem:[#allocation2 + $0x14] sm:$0xf] %v529
          %562 = vst [vmem:[#allocation2 + $0x18] sm:$0xf] %v530
          %563 = vst [vmem:[#allocation2 + $0x1c] sm:$0xf] %v531
          %564 = vst [vmem:[#allocation2 + $0x20] sm:$0xf] %v532
          %565 = vst [vmem:[#allocation2 + $0x24] sm:$0xf] %v533
          %566 = vst [vmem:[#allocation2 + $0x28] sm:$0xf] %v534
          %567 = vst [vmem:[#allocation2 + $0x2c] sm:$0xf] %v535
          %568 = vst [vmem:[#allocation2 + $0x30] sm:$0xf] %v536
          %569 = vst [vmem:[#allocation2 + $0x34] sm:$0xf] %v537
          %570 = vst [vmem:[#allocation2 + $0x38] sm:$0xf] %v538
          %571 = vst [vmem:[#allocation2 + $0x3c] sm:$0xf] %v539
          %vm572 = vcmask 7168
          %573 = vst.msk [vmem:[#allocation3] sm:$0xff] %vm572, -inf
          %574 = vst.msk [vmem:[#allocation3 + $0x8] sm:$0xff] %vm572, -inf
          %575 = vst.msk [vmem:[#allocation3 + $0x10] sm:$0xff] %vm572, -inf
          %576 = vst.msk [vmem:[#allocation3 + $0x18] sm:$0xff] %vm572, -inf
          %577 = vst.msk [vmem:[#allocation3 + $0x20] sm:$0xff] %vm572, -inf
          %578 = vst.msk [vmem:[#allocation3 + $0x28] sm:$0xff] %vm572, -inf
          %579 = vst.msk [vmem:[#allocation3 + $0x30] sm:$0xff] %vm572, -inf
          %580 = vst.msk [vmem:[#allocation3 + $0x38] sm:$0xff] %vm572, -inf
          %581 = vst.msk [vmem:[#allocation3 + $0x40] sm:$0xff] %vm572, -inf
          %582 = vst.msk [vmem:[#allocation3 + $0x48] sm:$0xff] %vm572, -inf
          %583 = vst.msk [vmem:[#allocation3 + $0x50] sm:$0xff] %vm572, -inf
          %584 = vst.msk [vmem:[#allocation3 + $0x58] sm:$0xff] %vm572, -inf
          %585 = vst.msk [vmem:[#allocation3 + $0x60] sm:$0xff] %vm572, -inf
          %586 = vst.msk [vmem:[#allocation3 + $0x68] sm:$0xff] %vm572, -inf
          %587 = vst.msk [vmem:[#allocation3 + $0x70] sm:$0xff] %vm572, -inf
          %588 = vst.msk [vmem:[#allocation3 + $0x78] sm:$0xff] %vm572, -inf
          %589 = vst.msk [vmem:[#allocation4] sm:$0xff] %vm572, 0.0
          %590 = vst.msk [vmem:[#allocation4 + $0x8] sm:$0xff] %vm572, 0.0
          %591 = vst.msk [vmem:[#allocation4 + $0x10] sm:$0xff] %vm572, 0.0
          %592 = vst.msk [vmem:[#allocation4 + $0x18] sm:$0xff] %vm572, 0.0
          %593 = vst.msk [vmem:[#allocation4 + $0x20] sm:$0xff] %vm572, 0.0
          %594 = vst.msk [vmem:[#allocation4 + $0x28] sm:$0xff] %vm572, 0.0
          %595 = vst.msk [vmem:[#allocation4 + $0x30] sm:$0xff] %vm572, 0.0
          %596 = vst.msk [vmem:[#allocation4 + $0x38] sm:$0xff] %vm572, 0.0
          %597 = vst.msk [vmem:[#allocation4 + $0x40] sm:$0xff] %vm572, 0.0
          %598 = vst.msk [vmem:[#allocation4 + $0x48] sm:$0xff] %vm572, 0.0
          %599 = vst.msk [vmem:[#allocation4 + $0x50] sm:$0xff] %vm572, 0.0
          %600 = vst.msk [vmem:[#allocation4 + $0x58] sm:$0xff] %vm572, 0.0
          %601 = vst.msk [vmem:[#allocation4 + $0x60] sm:$0xff] %vm572, 0.0
          %602 = vst.msk [vmem:[#allocation4 + $0x68] sm:$0xff] %vm572, 0.0
          %603 = vst.msk [vmem:[#allocation4 + $0x70] sm:$0xff] %vm572, 0.0
          %604 = vst.msk [vmem:[#allocation4 + $0x78] sm:$0xff] %vm572, 0.0
          %605 = vst [vmem:[#allocation5] sm:$0xff] 0.0
          %606 = vst [vmem:[#allocation5 + $0x8] sm:$0xff] 0.0
          %607 = vst [vmem:[#allocation5 + $0x10] sm:$0xff] 0.0
          %608 = vst [vmem:[#allocation5 + $0x18] sm:$0xff] 0.0
          %609 = vst [vmem:[#allocation5 + $0x20] sm:$0xff] 0.0
          %610 = vst [vmem:[#allocation5 + $0x28] sm:$0xff] 0.0
          %611 = vst [vmem:[#allocation5 + $0x30] sm:$0xff] 0.0
          %612 = vst [vmem:[#allocation5 + $0x38] sm:$0xff] 0.0
          %613 = vst [vmem:[#allocation5 + $0x40] sm:$0xff] 0.0
          %614 = vst [vmem:[#allocation5 + $0x48] sm:$0xff] 0.0
          %615 = vst [vmem:[#allocation5 + $0x50] sm:$0xff] 0.0
          %616 = vst [vmem:[#allocation5 + $0x58] sm:$0xff] 0.0
          %617 = vst [vmem:[#allocation5 + $0x60] sm:$0xff] 0.0
          %618 = vst [vmem:[#allocation5 + $0x68] sm:$0xff] 0.0
          %619 = vst [vmem:[#allocation5 + $0x70] sm:$0xff] 0.0
          %620 = vst [vmem:[#allocation5 + $0x78] sm:$0xff] 0.0
        $region56: #{tpu_custom_call.1} parent=43 // pred_fallthru
          _
        %v621 = vld [vmem:[%s301] sm:$0xf]
        %v622 = vld [vmem:[%s301 + $0x4] sm:$0xf]
        %v623 = vld [vmem:[%s301 + $0x8] sm:$0xf]
        %v624 = vld [vmem:[%s301 + $0xc] sm:$0xf]
        %v625 = vld [vmem:[%s301 + $0x10] sm:$0xf]
        %v626 = vld [vmem:[%s301 + $0x14] sm:$0xf]
        %v627 = vld [vmem:[%s301 + $0x18] sm:$0xf]
        %v628 = vld [vmem:[%s301 + $0x1c] sm:$0xf]
        %v629 = vld [vmem:[%s301 + $0x20] sm:$0xf]
        %v630 = vld [vmem:[%s301 + $0x24] sm:$0xf]
        %v631 = vld [vmem:[%s301 + $0x28] sm:$0xf]
        %v632 = vld [vmem:[%s301 + $0x2c] sm:$0xf]
        %v633 = vld [vmem:[%s301 + $0x30] sm:$0xf]
        %v634 = vld [vmem:[%s301 + $0x34] sm:$0xf]
        %v635 = vld [vmem:[%s301 + $0x38] sm:$0xf]
        %v636 = vld [vmem:[%s301 + $0x3c] sm:$0xf]
        %v637 = vld [vmem:[%s301 + $0x40] sm:$0xf]
        %v638 = vld [vmem:[%s301 + $0x44] sm:$0xf]
        %v639 = vld [vmem:[%s301 + $0x48] sm:$0xf]
        %v640 = vld [vmem:[%s301 + $0x4c] sm:$0xf]
        %v641 = vld [vmem:[%s301 + $0x50] sm:$0xf]
        %v642 = vld [vmem:[%s301 + $0x54] sm:$0xf]
        %v643 = vld [vmem:[%s301 + $0x58] sm:$0xf]
        %v644 = vld [vmem:[%s301 + $0x5c] sm:$0xf]
        %v645 = vld [vmem:[%s301 + $0x60] sm:$0xf]
        %v646 = vld [vmem:[%s301 + $0x64] sm:$0xf]
        %v647 = vld [vmem:[%s301 + $0x68] sm:$0xf]
        %v648 = vld [vmem:[%s301 + $0x6c] sm:$0xf]
        %v649 = vld [vmem:[%s301 + $0x70] sm:$0xf]
        %v650 = vld [vmem:[%s301 + $0x74] sm:$0xf]
        %v651 = vld [vmem:[%s301 + $0x78] sm:$0xf]
        %v652 = vld [vmem:[%s301 + $0x7c] sm:$0xf]
        %v653 = vld [vmem:[#allocation2] sm:$0xf]
        %v654 = vld [vmem:[#allocation2 + $0x4] sm:$0xf]
        %v655 = vld [vmem:[#allocation2 + $0x8] sm:$0xf]
        %v656 = vld [vmem:[#allocation2 + $0xc] sm:$0xf]
        %v657 = vld [vmem:[#allocation2 + $0x10] sm:$0xf]
        %v658 = vld [vmem:[#allocation2 + $0x14] sm:$0xf]
        %v659 = vld [vmem:[#allocation2 + $0x18] sm:$0xf]
        %v660 = vld [vmem:[#allocation2 + $0x1c] sm:$0xf]
        %v661 = vld [vmem:[#allocation2 + $0x20] sm:$0xf]
        %v662 = vld [vmem:[#allocation2 + $0x24] sm:$0xf]
        %v663 = vld [vmem:[#allocation2 + $0x28] sm:$0xf]
        %v664 = vld [vmem:[#allocation2 + $0x2c] sm:$0xf]
        %v665 = vld [vmem:[#allocation2 + $0x30] sm:$0xf]
        %v666 = vld [vmem:[#allocation2 + $0x34] sm:$0xf]
        %v667 = vld [vmem:[#allocation2 + $0x38] sm:$0xf]
        %v668 = vld [vmem:[#allocation2 + $0x3c] sm:$0xf]
        %v685 = vunpack.c.l.b16 %v653
        %v686 = vunpack.c.l.b16 %v654
        %v687 = vunpack.c.l.b16 %v655
        %v688 = vunpack.c.l.b16 %v656
        %v689 = vunpack.c.l.b16 %v657
        %v690 = vunpack.c.l.b16 %v658
        %v691 = vunpack.c.l.b16 %v659
        %v692 = vunpack.c.l.b16 %v660
        %v693 = vunpack.c.l.b16 %v661
        %v694 = vunpack.c.l.b16 %v662
        %v695 = vunpack.c.l.b16 %v663
        %v696 = vunpack.c.l.b16 %v664
        %v697 = vunpack.c.l.b16 %v665
        %v698 = vunpack.c.l.b16 %v666
        %v699 = vunpack.c.l.b16 %v667
        %v700 = vunpack.c.l.b16 %v668
        %v701 = vpack.c.b16 %v686, %v685
        %v702 = vpack.c.b16 %v688, %v687
        %v703 = vpack.c.b16 %v690, %v689
        %v704 = vpack.c.b16 %v692, %v691
        %v705 = vpack.c.b16 %v694, %v693
        %v706 = vpack.c.b16 %v696, %v695
        %v707 = vpack.c.b16 %v698, %v697
        %v708 = vpack.c.b16 %v700, %v699
        %v733 = vunpack.c.l.b16 %v621
        %v734 = vunpack.c.l.b16 %v622
        %v735 = vunpack.c.l.b16 %v623
        %v736 = vunpack.c.l.b16 %v624
        %v737 = vunpack.c.l.b16 %v625
        %v738 = vunpack.c.l.b16 %v626
        %v739 = vunpack.c.l.b16 %v627
        %v740 = vunpack.c.l.b16 %v628
        %v741 = vunpack.c.l.b16 %v629
        %v742 = vunpack.c.l.b16 %v630
        %v743 = vunpack.c.l.b16 %v631
        %v744 = vunpack.c.l.b16 %v632
        %v745 = vunpack.c.l.b16 %v633
        %v746 = vunpack.c.l.b16 %v634
        %v747 = vunpack.c.l.b16 %v635
        %v748 = vunpack.c.l.b16 %v636
        %v749 = vpack.c.b16 %v734, %v733
        %v750 = vpack.c.b16 %v736, %v735
        %v751 = vpack.c.b16 %v738, %v737
        %v752 = vpack.c.b16 %v740, %v739
        %v753 = vpack.c.b16 %v742, %v741
        %v754 = vpack.c.b16 %v744, %v743
        %v755 = vpack.c.b16 %v746, %v745
        %v756 = vpack.c.b16 %v748, %v747
        %765 = vmatprep.subr.bf16.mxu0 0
        %766 = vmatpush1.bf16.msra.mxu0 %v756
        %767 = vmatprep.subr.bf16.mxu0 0
        %768 = vmatpush1.bf16.msra.mxu0 %v755
        %769 = vmatprep.subr.bf16.mxu0 0
        %770 = vmatpush1.bf16.msra.mxu0 %v754
        %771 = vmatprep.subr.bf16.mxu0 0
        %772 = vmatpush1.bf16.msra.mxu0 %v753
        %773 = vmatprep.subr.bf16.mxu0 0
        %774 = vmatpush1.bf16.msra.mxu0 %v752
        %775 = vmatprep.subr.bf16.mxu0 0
        %776 = vmatpush1.bf16.msra.mxu0 %v751
        %777 = vmatprep.subr.bf16.mxu0 0
        %778 = vmatpush1.bf16.msra.mxu0 %v750
        %779 = vmatprep.subr.bf16.mxu0 0
        %780 = vmatpush1.bf16.msra.mxu0 %v749
        %781 = vmatprep.subr.bf16.mxu0 0
        %782 = vmatpush2.bf16.msra.mxu0 0
        %783 = vmatprep.subr.bf16.mxu0 0
        %784 = vmatpush2.bf16.msra.mxu0 0
        %785 = vmatprep.subr.bf16.mxu0 0
        %786 = vmatpush2.bf16.msra.mxu0 0
        %787 = vmatprep.subr.bf16.mxu0 0
        %788 = vmatpush2.bf16.msra.mxu0 0
        %789 = vmatprep.subr.bf16.mxu0 0
        %790 = vmatpush2.bf16.msra.mxu0 0
        %791 = vmatprep.subr.bf16.mxu0 0
        %792 = vmatpush2.bf16.msra.mxu0 0
        %793 = vmatprep.subr.bf16.mxu0 0
        %794 = vmatpush2.bf16.msra.mxu0 0
        %795 = vmatprep.subr.bf16.mxu0 0
        %796 = vmatpush2.bf16.msra.mxu0 0
        %797 = vmatprep.mubr.bf16.mxu0 0
        %798 = vmatmul.mubr.bf16.gmra.mxu0 %v701
        %v799 = vpop.f32.mrf.mxu0
        %v800 = vadd.f32 0.0, %v799
        %v801 = vpop.f32.mrf.mxu0
        %v802 = vpop.f32.mrf.mxu0
        %v803 = vadd.f32 0.0, %v802
        %v804 = vpop.f32.mrf.mxu0
        %805 = vmatprep.mubr.bf16.mxu0 0
        %806 = vmatmul.mubr.bf16.gmra.mxu0 %v702
        %v807 = vpop.f32.mrf.mxu0
        %v808 = vadd.f32 0.0, %v807
        %v809 = vpop.f32.mrf.mxu0
        %v810 = vpop.f32.mrf.mxu0
        %v811 = vadd.f32 0.0, %v810
        %v812 = vpop.f32.mrf.mxu0
        %813 = vmatprep.mubr.bf16.mxu0 0
        %814 = vmatmul.mubr.bf16.gmra.mxu0 %v703
        %v815 = vpop.f32.mrf.mxu0
        %v816 = vadd.f32 0.0, %v815
        %v817 = vpop.f32.mrf.mxu0
        %v818 = vpop.f32.mrf.mxu0
        %v819 = vadd.f32 0.0, %v818
        %v820 = vpop.f32.mrf.mxu0
        %821 = vmatprep.mubr.bf16.mxu0 0
        %822 = vmatmul.mubr.bf16.gmra.mxu0 %v704
        %v823 = vpop.f32.mrf.mxu0
        %v824 = vadd.f32 0.0, %v823
        %v825 = vpop.f32.mrf.mxu0
        %v826 = vpop.f32.mrf.mxu0
        %v827 = vadd.f32 0.0, %v826
        %v828 = vpop.f32.mrf.mxu0
        %829 = vmatprep.mubr.bf16.mxu0 0
        %830 = vmatmul.mubr.bf16.gmra.mxu0 %v705
        %v831 = vpop.f32.mrf.mxu0
        %v832 = vadd.f32 0.0, %v831
        %v833 = vpop.f32.mrf.mxu0
        %v834 = vpop.f32.mrf.mxu0
        %v835 = vadd.f32 0.0, %v834
        %v836 = vpop.f32.mrf.mxu0
        %837 = vmatprep.mubr.bf16.mxu0 0
        %838 = vmatmul.mubr.bf16.gmra.mxu0 %v706
        %v839 = vpop.f32.mrf.mxu0
        %v840 = vadd.f32 0.0, %v839
        %v841 = vpop.f32.mrf.mxu0
        %v842 = vpop.f32.mrf.mxu0
        %v843 = vadd.f32 0.0, %v842
        %v844 = vpop.f32.mrf.mxu0
        %845 = vmatprep.mubr.bf16.mxu0 0
        %846 = vmatmul.mubr.bf16.gmra.mxu0 %v707
        %v847 = vpop.f32.mrf.mxu0
        %v848 = vadd.f32 0.0, %v847
        %v849 = vpop.f32.mrf.mxu0
        %v850 = vpop.f32.mrf.mxu0
        %v851 = vadd.f32 0.0, %v850
        %v852 = vpop.f32.mrf.mxu0
        %853 = vmatprep.mubr.bf16.mxu0 0
        %854 = vmatmul.mubr.bf16.gmra.mxu0 %v708
        %v855 = vpop.f32.mrf.mxu0
        %v856 = vadd.f32 0.0, %v855
        %v857 = vpop.f32.mrf.mxu0
        %v858 = vpop.f32.mrf.mxu0
        %v859 = vadd.f32 0.0, %v858
        %v860 = vpop.f32.mrf.mxu0
        %861 = vdwg.mxu0
        %v862 = vld [vmem:[#allocation3] sm:$0xff]
        %v863 = vld [vmem:[#allocation3 + $0x8] sm:$0xff]
        %v864 = vld [vmem:[#allocation3 + $0x10] sm:$0xff]
        %v865 = vld [vmem:[#allocation3 + $0x18] sm:$0xff]
        %v866 = vld [vmem:[#allocation3 + $0x20] sm:$0xff]
        %v867 = vld [vmem:[#allocation3 + $0x28] sm:$0xff]
        %v868 = vld [vmem:[#allocation3 + $0x30] sm:$0xff]
        %v869 = vld [vmem:[#allocation3 + $0x38] sm:$0xff]
        %v870 = vld [vmem:[#allocation3 + $0x40] sm:$0xff]
        %v871 = vld [vmem:[#allocation3 + $0x48] sm:$0xff]
        %v872 = vld [vmem:[#allocation3 + $0x50] sm:$0xff]
        %v873 = vld [vmem:[#allocation3 + $0x58] sm:$0xff]
        %v874 = vld [vmem:[#allocation3 + $0x60] sm:$0xff]
        %v875 = vld [vmem:[#allocation3 + $0x68] sm:$0xff]
        %v876 = vld [vmem:[#allocation3 + $0x70] sm:$0xff]
        %v877 = vld [vmem:[#allocation3 + $0x78] sm:$0xff]
        %878 = vmax.xlane.f32.xlu0 %v800
        %v879 = vpop.xlane.xlu0 %878
        %880 = vmax.xlane.f32.xlu0 %v803
        %v881 = vpop.xlane.xlu0 %880
        %882 = vmax.xlane.f32.xlu0 %v808
        %v883 = vpop.xlane.xlu0 %882
        %884 = vmax.xlane.f32.xlu0 %v811
        %v885 = vpop.xlane.xlu0 %884
        %886 = vmax.xlane.f32.xlu0 %v816
        %v887 = vpop.xlane.xlu0 %886
        %888 = vmax.xlane.f32.xlu0 %v819
        %v889 = vpop.xlane.xlu0 %888
        %890 = vmax.xlane.f32.xlu0 %v824
        %v891 = vpop.xlane.xlu0 %890
        %892 = vmax.xlane.f32.xlu0 %v827
        %v893 = vpop.xlane.xlu0 %892
        %894 = vmax.xlane.f32.xlu0 %v832
        %v895 = vpop.xlane.xlu0 %894
        %896 = vmax.xlane.f32.xlu0 %v835
        %v897 = vpop.xlane.xlu0 %896
        %898 = vmax.xlane.f32.xlu0 %v840
        %v899 = vpop.xlane.xlu0 %898
        %900 = vmax.xlane.f32.xlu0 %v843
        %v901 = vpop.xlane.xlu0 %900
        %902 = vmax.xlane.f32.xlu0 %v848
        %v903 = vpop.xlane.xlu0 %902
        %904 = vmax.xlane.f32.xlu0 %v851
        %v905 = vpop.xlane.xlu0 %904
        %906 = vmax.xlane.f32.xlu0 %v856
        %v907 = vpop.xlane.xlu0 %906
        %908 = vmax.xlane.f32.xlu0 %v859
        %v909 = vpop.xlane.xlu0 %908
        %v910 = vmax.f32 %v862, %v879
        %v911 = vmax.f32 %v863, %v881
        %v912 = vmax.f32 %v864, %v883
        %v913 = vmax.f32 %v865, %v885
        %v914 = vmax.f32 %v866, %v887
        %v915 = vmax.f32 %v867, %v889
        %v916 = vmax.f32 %v868, %v891
        %v917 = vmax.f32 %v869, %v893
        %v918 = vmax.f32 %v870, %v895
        %v919 = vmax.f32 %v871, %v897
        %v920 = vmax.f32 %v872, %v899
        %v921 = vmax.f32 %v873, %v901
        %v922 = vmax.f32 %v874, %v903
        %v923 = vmax.f32 %v875, %v905
        %v924 = vmax.f32 %v876, %v907
        %v925 = vmax.f32 %v877, %v909
        %v926 = vsub.f32 %v862, %v910
        %v927 = vsub.f32 %v863, %v911
        %v928 = vsub.f32 %v864, %v912
        %v929 = vsub.f32 %v865, %v913
        %v930 = vsub.f32 %v866, %v914
        %v931 = vsub.f32 %v867, %v915
        %v932 = vsub.f32 %v868, %v916
        %v933 = vsub.f32 %v869, %v917
        %v934 = vsub.f32 %v870, %v918
        %v935 = vsub.f32 %v871, %v919
        %v936 = vsub.f32 %v872, %v920
        %v937 = vsub.f32 %v873, %v921
        %v938 = vsub.f32 %v874, %v922
        %v939 = vsub.f32 %v875, %v923
        %v940 = vsub.f32 %v876, %v924
        %v941 = vsub.f32 %v877, %v925
        %v942 = vmul.f32 %v926, 1.442695
        %v943 = vpow.pop %v942
        %v944 = vmul.f32 %v927, 1.442695
        %v945 = vpow.pop %v944
        %v946 = vmul.f32 %v928, 1.442695
        %v947 = vpow.pop %v946
        %v948 = vmul.f32 %v929, 1.442695
        %v949 = vpow.pop %v948
        %v950 = vmul.f32 %v930, 1.442695
        %v951 = vpow.pop %v950
        %v952 = vmul.f32 %v931, 1.442695
        %v953 = vpow.pop %v952
        %v954 = vmul.f32 %v932, 1.442695
        %v955 = vpow.pop %v954
        %v956 = vmul.f32 %v933, 1.442695
        %v957 = vpow.pop %v956
        %v958 = vmul.f32 %v934, 1.442695
        %v959 = vpow.pop %v958
        %v960 = vmul.f32 %v935, 1.442695
        %v961 = vpow.pop %v960
        %v962 = vmul.f32 %v936, 1.442695
        %v963 = vpow.pop %v962
        %v964 = vmul.f32 %v937, 1.442695
        %v965 = vpow.pop %v964
        %v966 = vmul.f32 %v938, 1.442695
        %v967 = vpow.pop %v966
        %v968 = vmul.f32 %v939, 1.442695
        %v969 = vpow.pop %v968
        %v970 = vmul.f32 %v940, 1.442695
        %v971 = vpow.pop %v970
        %v972 = vmul.f32 %v941, 1.442695
        %v973 = vpow.pop %v972
        %975 = vset.pattern.permute.xlu0 0
        %976 = vperm.xlu0 %975, %v910
        %v977 = vpop.permute.xlu0 %976
        %980 = vset.pattern.permute.xlu0 0
        %981 = vperm.xlu0 %980, %v911
        %v982 = vpop.permute.xlu0 %981
        %985 = vset.pattern.permute.xlu0 0
        %986 = vperm.xlu0 %985, %v912
        %v987 = vpop.permute.xlu0 %986
        %990 = vset.pattern.permute.xlu0 0
        %991 = vperm.xlu0 %990, %v913
        %v992 = vpop.permute.xlu0 %991
        %995 = vset.pattern.permute.xlu0 0
        %996 = vperm.xlu0 %995, %v914
        %v997 = vpop.permute.xlu0 %996
        %1000 = vset.pattern.permute.xlu0 0
        %1001 = vperm.xlu0 %1000, %v915
        %v1002 = vpop.permute.xlu0 %1001
        %1005 = vset.pattern.permute.xlu0 0
        %1006 = vperm.xlu0 %1005, %v916
        %v1007 = vpop.permute.xlu0 %1006
        %1010 = vset.pattern.permute.xlu0 0
        %1011 = vperm.xlu0 %1010, %v917
        %v1012 = vpop.permute.xlu0 %1011
        %1015 = vset.pattern.permute.xlu0 0
        %1016 = vperm.xlu0 %1015, %v918
        %v1017 = vpop.permute.xlu0 %1016
        %1020 = vset.pattern.permute.xlu0 0
        %1021 = vperm.xlu0 %1020, %v919
        %v1022 = vpop.permute.xlu0 %1021
        %1025 = vset.pattern.permute.xlu0 0
        %1026 = vperm.xlu0 %1025, %v920
        %v1027 = vpop.permute.xlu0 %1026
        %1030 = vset.pattern.permute.xlu0 0
        %1031 = vperm.xlu0 %1030, %v921
        %v1032 = vpop.permute.xlu0 %1031
        %1035 = vset.pattern.permute.xlu0 0
        %1036 = vperm.xlu0 %1035, %v922
        %v1037 = vpop.permute.xlu0 %1036
        %1040 = vset.pattern.permute.xlu0 0
        %1041 = vperm.xlu0 %1040, %v923
        %v1042 = vpop.permute.xlu0 %1041
        %1045 = vset.pattern.permute.xlu0 0
        %1046 = vperm.xlu0 %1045, %v924
        %v1047 = vpop.permute.xlu0 %1046
        %1050 = vset.pattern.permute.xlu0 0
        %1051 = vperm.xlu0 %1050, %v925
        %v1052 = vpop.permute.xlu0 %1051
        %v1054 = vsub.f32 %v800, %v977
        %v1055 = vsub.f32 %v803, %v982
        %v1056 = vsub.f32 %v808, %v987
        %v1057 = vsub.f32 %v811, %v992
        %v1058 = vsub.f32 %v816, %v997
        %v1059 = vsub.f32 %v819, %v1002
        %v1060 = vsub.f32 %v824, %v1007
        %v1061 = vsub.f32 %v827, %v1012
        %v1062 = vsub.f32 %v832, %v1017
        %v1063 = vsub.f32 %v835, %v1022
        %v1064 = vsub.f32 %v840, %v1027
        %v1065 = vsub.f32 %v843, %v1032
        %v1066 = vsub.f32 %v848, %v1037
        %v1067 = vsub.f32 %v851, %v1042
        %v1068 = vsub.f32 %v856, %v1047
        %v1069 = vsub.f32 %v859, %v1052
        %v1070 = vmul.f32 %v1054, 1.442695
        %v1071 = vpow.pop %v1070
        %v1072 = vmul.f32 %v1055, 1.442695
        %v1073 = vpow.pop %v1072
        %v1074 = vmul.f32 %v1056, 1.442695
        %v1075 = vpow.pop %v1074
        %v1076 = vmul.f32 %v1057, 1.442695
        %v1077 = vpow.pop %v1076
        %v1078 = vmul.f32 %v1058, 1.442695
        %v1079 = vpow.pop %v1078
        %v1080 = vmul.f32 %v1059, 1.442695
        %v1081 = vpow.pop %v1080
        %v1082 = vmul.f32 %v1060, 1.442695
        %v1083 = vpow.pop %v1082
        %v1084 = vmul.f32 %v1061, 1.442695
        %v1085 = vpow.pop %v1084
        %v1086 = vmul.f32 %v1062, 1.442695
        %v1087 = vpow.pop %v1086
        %v1088 = vmul.f32 %v1063, 1.442695
        %v1089 = vpow.pop %v1088
        %v1090 = vmul.f32 %v1064, 1.442695
        %v1091 = vpow.pop %v1090
        %v1092 = vmul.f32 %v1065, 1.442695
        %v1093 = vpow.pop %v1092
        %v1094 = vmul.f32 %v1066, 1.442695
        %v1095 = vpow.pop %v1094
        %v1096 = vmul.f32 %v1067, 1.442695
        %v1097 = vpow.pop %v1096
        %v1098 = vmul.f32 %v1068, 1.442695
        %v1099 = vpow.pop %v1098
        %v1100 = vmul.f32 %v1069, 1.442695
        %v1101 = vpow.pop %v1100
        %1102 = vadd.xlane.f32.xlu0 %v1071
        %v1103 = vpop.xlane.xlu0 %1102
        %1104 = vadd.xlane.f32.xlu0 %v1073
        %v1105 = vpop.xlane.xlu0 %1104
        %1106 = vadd.xlane.f32.xlu0 %v1075
        %v1107 = vpop.xlane.xlu0 %1106
        %1108 = vadd.xlane.f32.xlu0 %v1077
        %v1109 = vpop.xlane.xlu0 %1108
        %1110 = vadd.xlane.f32.xlu0 %v1079
        %v1111 = vpop.xlane.xlu0 %1110
        %1112 = vadd.xlane.f32.xlu0 %v1081
        %v1113 = vpop.xlane.xlu0 %1112
        %1114 = vadd.xlane.f32.xlu0 %v1083
        %v1115 = vpop.xlane.xlu0 %1114
        %1116 = vadd.xlane.f32.xlu0 %v1085
        %v1117 = vpop.xlane.xlu0 %1116
        %1118 = vadd.xlane.f32.xlu0 %v1087
        %v1119 = vpop.xlane.xlu0 %1118
        %1120 = vadd.xlane.f32.xlu0 %v1089
        %v1121 = vpop.xlane.xlu0 %1120
        %1122 = vadd.xlane.f32.xlu0 %v1091
        %v1123 = vpop.xlane.xlu0 %1122
        %1124 = vadd.xlane.f32.xlu0 %v1093
        %v1125 = vpop.xlane.xlu0 %1124
        %1126 = vadd.xlane.f32.xlu0 %v1095
        %v1127 = vpop.xlane.xlu0 %1126
        %1128 = vadd.xlane.f32.xlu0 %v1097
        %v1129 = vpop.xlane.xlu0 %1128
        %1130 = vadd.xlane.f32.xlu0 %v1099
        %v1131 = vpop.xlane.xlu0 %1130
        %1132 = vadd.xlane.f32.xlu0 %v1101
        %v1133 = vpop.xlane.xlu0 %1132
        %v1134 = vld [vmem:[#allocation4] sm:$0xff]
        %v1135 = vld [vmem:[#allocation4 + $0x8] sm:$0xff]
        %v1136 = vld [vmem:[#allocation4 + $0x10] sm:$0xff]
        %v1137 = vld [vmem:[#allocation4 + $0x18] sm:$0xff]
        %v1138 = vld [vmem:[#allocation4 + $0x20] sm:$0xff]
        %v1139 = vld [vmem:[#allocation4 + $0x28] sm:$0xff]
        %v1140 = vld [vmem:[#allocation4 + $0x30] sm:$0xff]
        %v1141 = vld [vmem:[#allocation4 + $0x38] sm:$0xff]
        %v1142 = vld [vmem:[#allocation4 + $0x40] sm:$0xff]
        %v1143 = vld [vmem:[#allocation4 + $0x48] sm:$0xff]
        %v1144 = vld [vmem:[#allocation4 + $0x50] sm:$0xff]
        %v1145 = vld [vmem:[#allocation4 + $0x58] sm:$0xff]
        %v1146 = vld [vmem:[#allocation4 + $0x60] sm:$0xff]
        %v1147 = vld [vmem:[#allocation4 + $0x68] sm:$0xff]
        %v1148 = vld [vmem:[#allocation4 + $0x70] sm:$0xff]
        %v1149 = vld [vmem:[#allocation4 + $0x78] sm:$0xff]
        %v1150 = vmul.f32 %v943, %v1134
        %v1151 = vmul.f32 %v945, %v1135
        %v1152 = vmul.f32 %v947, %v1136
        %v1153 = vmul.f32 %v949, %v1137
        %v1154 = vmul.f32 %v951, %v1138
        %v1155 = vmul.f32 %v953, %v1139
        %v1156 = vmul.f32 %v955, %v1140
        %v1157 = vmul.f32 %v957, %v1141
        %v1158 = vmul.f32 %v959, %v1142
        %v1159 = vmul.f32 %v961, %v1143
        %v1160 = vmul.f32 %v963, %v1144
        %v1161 = vmul.f32 %v965, %v1145
        %v1162 = vmul.f32 %v967, %v1146
        %v1163 = vmul.f32 %v969, %v1147
        %v1164 = vmul.f32 %v971, %v1148
        %v1165 = vmul.f32 %v973, %v1149
        %v1166 = vadd.f32 %v1150, %v1103
        %v1167 = vadd.f32 %v1151, %v1105
        %v1168 = vadd.f32 %v1152, %v1107
        %v1169 = vadd.f32 %v1153, %v1109
        %v1170 = vadd.f32 %v1154, %v1111
        %v1171 = vadd.f32 %v1155, %v1113
        %v1172 = vadd.f32 %v1156, %v1115
        %v1173 = vadd.f32 %v1157, %v1117
        %v1174 = vadd.f32 %v1158, %v1119
        %v1175 = vadd.f32 %v1159, %v1121
        %v1176 = vadd.f32 %v1160, %v1123
        %v1177 = vadd.f32 %v1161, %v1125
        %v1178 = vadd.f32 %v1162, %v1127
        %v1179 = vadd.f32 %v1163, %v1129
        %v1180 = vadd.f32 %v1164, %v1131
        %v1181 = vadd.f32 %v1165, %v1133
        %vm1182 = vcmask 7168
        %1183 = vst.msk [vmem:[#allocation4] sm:$0xff] %vm1182, %v1166
        %1184 = vst.msk [vmem:[#allocation4 + $0x8] sm:$0xff] %vm1182, %v1167
        %1185 = vst.msk [vmem:[#allocation4 + $0x10] sm:$0xff] %vm1182, %v1168
        %1186 = vst.msk [vmem:[#allocation4 + $0x18] sm:$0xff] %vm1182, %v1169
        %1187 = vst.msk [vmem:[#allocation4 + $0x20] sm:$0xff] %vm1182, %v1170
        %1188 = vst.msk [vmem:[#allocation4 + $0x28] sm:$0xff] %vm1182, %v1171
        %1189 = vst.msk [vmem:[#allocation4 + $0x30] sm:$0xff] %vm1182, %v1172
        %1190 = vst.msk [vmem:[#allocation4 + $0x38] sm:$0xff] %vm1182, %v1173
        %1191 = vst.msk [vmem:[#allocation4 + $0x40] sm:$0xff] %vm1182, %v1174
        %1192 = vst.msk [vmem:[#allocation4 + $0x48] sm:$0xff] %vm1182, %v1175
        %1193 = vst.msk [vmem:[#allocation4 + $0x50] sm:$0xff] %vm1182, %v1176
        %1194 = vst.msk [vmem:[#allocation4 + $0x58] sm:$0xff] %vm1182, %v1177
        %1195 = vst.msk [vmem:[#allocation4 + $0x60] sm:$0xff] %vm1182, %v1178
        %1196 = vst.msk [vmem:[#allocation4 + $0x68] sm:$0xff] %vm1182, %v1179
        %1197 = vst.msk [vmem:[#allocation4 + $0x70] sm:$0xff] %vm1182, %v1180
        %1198 = vst.msk [vmem:[#allocation4 + $0x78] sm:$0xff] %vm1182, %v1181
        %v1199 = vpack.c.bf16 %v1073, %v1071
        %v1200 = vpack.c.bf16 %v1077, %v1075
        %v1201 = vpack.c.bf16 %v1081, %v1079
        %v1202 = vpack.c.bf16 %v1085, %v1083
        %v1203 = vpack.c.bf16 %v1089, %v1087
        %v1204 = vpack.c.bf16 %v1093, %v1091
        %v1205 = vpack.c.bf16 %v1097, %v1095
        %v1206 = vpack.c.bf16 %v1101, %v1099
        %v1223 = vunpack.c.l.b16 %v637
        %v1224 = vunpack.c.l.b16 %v638
        %v1225 = vunpack.c.l.b16 %v639
        %v1226 = vunpack.c.l.b16 %v640
        %v1227 = vunpack.c.l.b16 %v641
        %v1228 = vunpack.c.l.b16 %v642
        %v1229 = vunpack.c.l.b16 %v643
        %v1230 = vunpack.c.l.b16 %v644
        %v1231 = vunpack.c.l.b16 %v645
        %v1232 = vunpack.c.l.b16 %v646
        %v1233 = vunpack.c.l.b16 %v647
        %v1234 = vunpack.c.l.b16 %v648
        %v1235 = vunpack.c.l.b16 %v649
        %v1236 = vunpack.c.l.b16 %v650
        %v1237 = vunpack.c.l.b16 %v651
        %v1238 = vunpack.c.l.b16 %v652
        %v1239 = vpack.c.b16 %v1224, %v1223
        %v1240 = vpack.c.b16 %v1226, %v1225
        %v1241 = vpack.c.b16 %v1228, %v1227
        %v1242 = vpack.c.b16 %v1230, %v1229
        %v1243 = vpack.c.b16 %v1232, %v1231
        %v1244 = vpack.c.b16 %v1234, %v1233
        %v1245 = vpack.c.b16 %v1236, %v1235
        %v1246 = vpack.c.b16 %v1238, %v1237
        %1255 = vmatprep.subr.bf16.mxu0 0
        %1256 = vmatpush1.bf16.xpose.msra.mxu0 %v1246
        %1257 = vmatprep.subr.bf16.mxu0 0
        %1258 = vmatpush1.bf16.xpose.msra.mxu0 %v1245
        %1259 = vmatprep.subr.bf16.mxu0 0
        %1260 = vmatpush1.bf16.xpose.msra.mxu0 %v1244
        %1261 = vmatprep.subr.bf16.mxu0 0
        %1262 = vmatpush1.bf16.xpose.msra.mxu0 %v1243
        %1263 = vmatprep.subr.bf16.mxu0 0
        %1264 = vmatpush1.bf16.xpose.msra.mxu0 %v1242
        %1265 = vmatprep.subr.bf16.mxu0 0
        %1266 = vmatpush1.bf16.xpose.msra.mxu0 %v1241
        %1267 = vmatprep.subr.bf16.mxu0 0
        %1268 = vmatpush1.bf16.xpose.msra.mxu0 %v1240
        %1269 = vmatprep.subr.bf16.mxu0 0
        %1270 = vmatpush1.bf16.xpose.msra.mxu0 %v1239
        %1271 = vmatprep.subr.bf16.mxu0 0
        %1272 = vmatpush2.bf16.xpose.msra.mxu0 0
        %1273 = vmatprep.subr.bf16.mxu0 0
        %1274 = vmatpush2.bf16.xpose.msra.mxu0 0
        %1275 = vmatprep.subr.bf16.mxu0 0
        %1276 = vmatpush2.bf16.xpose.msra.mxu0 0
        %1277 = vmatprep.subr.bf16.mxu0 0
        %1278 = vmatpush2.bf16.xpose.msra.mxu0 0
        %1279 = vmatprep.subr.bf16.mxu0 0
        %1280 = vmatpush2.bf16.xpose.msra.mxu0 0
        %1281 = vmatprep.subr.bf16.mxu0 0
        %1282 = vmatpush2.bf16.xpose.msra.mxu0 0
        %1283 = vmatprep.subr.bf16.mxu0 0
        %1284 = vmatpush2.bf16.xpose.msra.mxu0 0
        %1285 = vmatprep.subr.bf16.mxu0 0
        %1286 = vmatpush2.bf16.xpose.msra.mxu0 0
        %1287 = vmatprep.mubr.bf16.mxu0 0
        %1288 = vmatmul.mubr.bf16.gmra.mxu0 %v1199
        %v1289 = vpop.f32.mrf.mxu0
        %v1290 = vadd.f32 0.0, %v1289
        %v1291 = vpop.f32.mrf.mxu0
        %v1292 = vpop.f32.mrf.mxu0
        %v1293 = vadd.f32 0.0, %v1292
        %v1294 = vpop.f32.mrf.mxu0
        %1295 = vmatprep.mubr.bf16.mxu0 0
        %1296 = vmatmul.mubr.bf16.gmra.mxu0 %v1200
        %v1297 = vpop.f32.mrf.mxu0
        %v1298 = vadd.f32 0.0, %v1297
        %v1299 = vpop.f32.mrf.mxu0
        %v1300 = vpop.f32.mrf.mxu0
        %v1301 = vadd.f32 0.0, %v1300
        %v1302 = vpop.f32.mrf.mxu0
        %1303 = vmatprep.mubr.bf16.mxu0 0
        %1304 = vmatmul.mubr.bf16.gmra.mxu0 %v1201
        %v1305 = vpop.f32.mrf.mxu0
        %v1306 = vadd.f32 0.0, %v1305
        %v1307 = vpop.f32.mrf.mxu0
        %v1308 = vpop.f32.mrf.mxu0
        %v1309 = vadd.f32 0.0, %v1308
        %v1310 = vpop.f32.mrf.mxu0
        %1311 = vmatprep.mubr.bf16.mxu0 0
        %1312 = vmatmul.mubr.bf16.gmra.mxu0 %v1202
        %v1313 = vpop.f32.mrf.mxu0
        %v1314 = vadd.f32 0.0, %v1313
        %v1315 = vpop.f32.mrf.mxu0
        %v1316 = vpop.f32.mrf.mxu0
        %v1317 = vadd.f32 0.0, %v1316
        %v1318 = vpop.f32.mrf.mxu0
        %1319 = vmatprep.mubr.bf16.mxu0 0
        %1320 = vmatmul.mubr.bf16.gmra.mxu0 %v1203
        %v1321 = vpop.f32.mrf.mxu0
        %v1322 = vadd.f32 0.0, %v1321
        %v1323 = vpop.f32.mrf.mxu0
        %v1324 = vpop.f32.mrf.mxu0
        %v1325 = vadd.f32 0.0, %v1324
        %v1326 = vpop.f32.mrf.mxu0
        %1327 = vmatprep.mubr.bf16.mxu0 0
        %1328 = vmatmul.mubr.bf16.gmra.mxu0 %v1204
        %v1329 = vpop.f32.mrf.mxu0
        %v1330 = vadd.f32 0.0, %v1329
        %v1331 = vpop.f32.mrf.mxu0
        %v1332 = vpop.f32.mrf.mxu0
        %v1333 = vadd.f32 0.0, %v1332
        %v1334 = vpop.f32.mrf.mxu0
        %1335 = vmatprep.mubr.bf16.mxu0 0
        %1336 = vmatmul.mubr.bf16.gmra.mxu0 %v1205
        %v1337 = vpop.f32.mrf.mxu0
        %v1338 = vadd.f32 0.0, %v1337
        %v1339 = vpop.f32.mrf.mxu0
        %v1340 = vpop.f32.mrf.mxu0
        %v1341 = vadd.f32 0.0, %v1340
        %v1342 = vpop.f32.mrf.mxu0
        %1343 = vmatprep.mubr.bf16.mxu0 0
        %1344 = vmatmul.mubr.bf16.gmra.mxu0 %v1206
        %v1345 = vpop.f32.mrf.mxu0
        %v1346 = vadd.f32 0.0, %v1345
        %v1347 = vpop.f32.mrf.mxu0
        %v1348 = vpop.f32.mrf.mxu0
        %v1349 = vadd.f32 0.0, %v1348
        %v1350 = vpop.f32.mrf.mxu0
        %1351 = vdwg.mxu0
        %v1352 = vld [vmem:[#allocation5] sm:$0xff]
        %v1353 = vld [vmem:[#allocation5 + $0x8] sm:$0xff]
        %v1354 = vld [vmem:[#allocation5 + $0x10] sm:$0xff]
        %v1355 = vld [vmem:[#allocation5 + $0x18] sm:$0xff]
        %v1356 = vld [vmem:[#allocation5 + $0x20] sm:$0xff]
        %v1357 = vld [vmem:[#allocation5 + $0x28] sm:$0xff]
        %v1358 = vld [vmem:[#allocation5 + $0x30] sm:$0xff]
        %v1359 = vld [vmem:[#allocation5 + $0x38] sm:$0xff]
        %v1360 = vld [vmem:[#allocation5 + $0x40] sm:$0xff]
        %v1361 = vld [vmem:[#allocation5 + $0x48] sm:$0xff]
        %v1362 = vld [vmem:[#allocation5 + $0x50] sm:$0xff]
        %v1363 = vld [vmem:[#allocation5 + $0x58] sm:$0xff]
        %v1364 = vld [vmem:[#allocation5 + $0x60] sm:$0xff]
        %v1365 = vld [vmem:[#allocation5 + $0x68] sm:$0xff]
        %v1366 = vld [vmem:[#allocation5 + $0x70] sm:$0xff]
        %v1367 = vld [vmem:[#allocation5 + $0x78] sm:$0xff]
        %1369 = vset.pattern.permute.xlu0 0
        %1370 = vperm.xlu0 %1369, %v943
        %v1371 = vpop.permute.xlu0 %1370
        %1374 = vset.pattern.permute.xlu0 0
        %1375 = vperm.xlu0 %1374, %v945
        %v1376 = vpop.permute.xlu0 %1375
        %1379 = vset.pattern.permute.xlu0 0
        %1380 = vperm.xlu0 %1379, %v947
        %v1381 = vpop.permute.xlu0 %1380
        %1384 = vset.pattern.permute.xlu0 0
        %1385 = vperm.xlu0 %1384, %v949
        %v1386 = vpop.permute.xlu0 %1385
        %1389 = vset.pattern.permute.xlu0 0
        %1390 = vperm.xlu0 %1389, %v951
        %v1391 = vpop.permute.xlu0 %1390
        %1394 = vset.pattern.permute.xlu0 0
        %1395 = vperm.xlu0 %1394, %v953
        %v1396 = vpop.permute.xlu0 %1395
        %1399 = vset.pattern.permute.xlu0 0
        %1400 = vperm.xlu0 %1399, %v955
        %v1401 = vpop.permute.xlu0 %1400
        %1404 = vset.pattern.permute.xlu0 0
        %1405 = vperm.xlu0 %1404, %v957
        %v1406 = vpop.permute.xlu0 %1405
        %1409 = vset.pattern.permute.xlu0 0
        %1410 = vperm.xlu0 %1409, %v959
        %v1411 = vpop.permute.xlu0 %1410
        %1414 = vset.pattern.permute.xlu0 0
        %1415 = vperm.xlu0 %1414, %v961
        %v1416 = vpop.permute.xlu0 %1415
        %1419 = vset.pattern.permute.xlu0 0
        %1420 = vperm.xlu0 %1419, %v963
        %v1421 = vpop.permute.xlu0 %1420
        %1424 = vset.pattern.permute.xlu0 0
        %1425 = vperm.xlu0 %1424, %v965
        %v1426 = vpop.permute.xlu0 %1425
        %1429 = vset.pattern.permute.xlu0 0
        %1430 = vperm.xlu0 %1429, %v967
        %v1431 = vpop.permute.xlu0 %1430
        %1434 = vset.pattern.permute.xlu0 0
        %1435 = vperm.xlu0 %1434, %v969
        %v1436 = vpop.permute.xlu0 %1435
        %1439 = vset.pattern.permute.xlu0 0
        %1440 = vperm.xlu0 %1439, %v971
        %v1441 = vpop.permute.xlu0 %1440
        %1444 = vset.pattern.permute.xlu0 0
        %1445 = vperm.xlu0 %1444, %v973
        %v1446 = vpop.permute.xlu0 %1445
        %v1448 = vmul.f32 %v1371, %v1352
        %v1449 = vmul.f32 %v1376, %v1353
        %v1450 = vmul.f32 %v1381, %v1354
        %v1451 = vmul.f32 %v1386, %v1355
        %v1452 = vmul.f32 %v1391, %v1356
        %v1453 = vmul.f32 %v1396, %v1357
        %v1454 = vmul.f32 %v1401, %v1358
        %v1455 = vmul.f32 %v1406, %v1359
        %v1456 = vmul.f32 %v1411, %v1360
        %v1457 = vmul.f32 %v1416, %v1361
        %v1458 = vmul.f32 %v1421, %v1362
        %v1459 = vmul.f32 %v1426, %v1363
        %v1460 = vmul.f32 %v1431, %v1364
        %v1461 = vmul.f32 %v1436, %v1365
        %v1462 = vmul.f32 %v1441, %v1366
        %v1463 = vmul.f32 %v1446, %v1367
        %v1464 = vadd.f32 %v1448, %v1290
        %v1465 = vadd.f32 %v1449, %v1293
        %v1466 = vadd.f32 %v1450, %v1298
        %v1467 = vadd.f32 %v1451, %v1301
        %v1468 = vadd.f32 %v1452, %v1306
        %v1469 = vadd.f32 %v1453, %v1309
        %v1470 = vadd.f32 %v1454, %v1314
        %v1471 = vadd.f32 %v1455, %v1317
        %v1472 = vadd.f32 %v1456, %v1322
        %v1473 = vadd.f32 %v1457, %v1325
        %v1474 = vadd.f32 %v1458, %v1330
        %v1475 = vadd.f32 %v1459, %v1333
        %v1476 = vadd.f32 %v1460, %v1338
        %v1477 = vadd.f32 %v1461, %v1341
        %v1478 = vadd.f32 %v1462, %v1346
        %v1479 = vadd.f32 %v1463, %v1349
        %1480 = vst [vmem:[#allocation5] sm:$0xff] %v1464
        %1481 = vst [vmem:[#allocation5 + $0x8] sm:$0xff] %v1465
        %1482 = vst [vmem:[#allocation5 + $0x10] sm:$0xff] %v1466
        %1483 = vst [vmem:[#allocation5 + $0x18] sm:$0xff] %v1467
        %1484 = vst [vmem:[#allocation5 + $0x20] sm:$0xff] %v1468
        %1485 = vst [vmem:[#allocation5 + $0x28] sm:$0xff] %v1469
        %1486 = vst [vmem:[#allocation5 + $0x30] sm:$0xff] %v1470
        %1487 = vst [vmem:[#allocation5 + $0x38] sm:$0xff] %v1471
        %1488 = vst [vmem:[#allocation5 + $0x40] sm:$0xff] %v1472
        %1489 = vst [vmem:[#allocation5 + $0x48] sm:$0xff] %v1473
        %1490 = vst [vmem:[#allocation5 + $0x50] sm:$0xff] %v1474
        %1491 = vst [vmem:[#allocation5 + $0x58] sm:$0xff] %v1475
        %1492 = vst [vmem:[#allocation5 + $0x60] sm:$0xff] %v1476
        %1493 = vst [vmem:[#allocation5 + $0x68] sm:$0xff] %v1477
        %1494 = vst [vmem:[#allocation5 + $0x70] sm:$0xff] %v1478
        %1495 = vst [vmem:[#allocation5 + $0x78] sm:$0xff] %v1479
        %1496 = vst.msk [vmem:[#allocation3] sm:$0xff] %vm1182, %v910
        %1497 = vst.msk [vmem:[#allocation3 + $0x8] sm:$0xff] %vm1182, %v911
        %1498 = vst.msk [vmem:[#allocation3 + $0x10] sm:$0xff] %vm1182, %v912
        %1499 = vst.msk [vmem:[#allocation3 + $0x18] sm:$0xff] %vm1182, %v913
        %1500 = vst.msk [vmem:[#allocation3 + $0x20] sm:$0xff] %vm1182, %v914
        %1501 = vst.msk [vmem:[#allocation3 + $0x28] sm:$0xff] %vm1182, %v915
        %1502 = vst.msk [vmem:[#allocation3 + $0x30] sm:$0xff] %vm1182, %v916
        %1503 = vst.msk [vmem:[#allocation3 + $0x38] sm:$0xff] %vm1182, %v917
        %1504 = vst.msk [vmem:[#allocation3 + $0x40] sm:$0xff] %vm1182, %v918
        %1505 = vst.msk [vmem:[#allocation3 + $0x48] sm:$0xff] %vm1182, %v919
        %1506 = vst.msk [vmem:[#allocation3 + $0x50] sm:$0xff] %vm1182, %v920
        %1507 = vst.msk [vmem:[#allocation3 + $0x58] sm:$0xff] %vm1182, %v921
        %1508 = vst.msk [vmem:[#allocation3 + $0x60] sm:$0xff] %vm1182, %v922
        %1509 = vst.msk [vmem:[#allocation3 + $0x68] sm:$0xff] %vm1182, %v923
        %1510 = vst.msk [vmem:[#allocation3 + $0x70] sm:$0xff] %vm1182, %v924
        %1511 = vst.msk [vmem:[#allocation3 + $0x78] sm:$0xff] %vm1182, %v925
        %p1512 = scmp.eq.s32.totalorder %s33, 1
        // Predicated region
        $region57: #{tpu_custom_call.1} parent=43 // pred_check
          %p1513 = pneg %p1512
        $region58: #{tpu_custom_call.1} parent=43 // pred_check_branch
          %1515 = sbr.rel (%p1513) target = $region60
        $region59: #{tpu_custom_call.1} parent=43 // pred_region
          %v1516 = vld [vmem:[#allocation4] sm:$0xff]
          %v1517 = vld [vmem:[#allocation4 + $0x8] sm:$0xff]
          %v1518 = vld [vmem:[#allocation4 + $0x10] sm:$0xff]
          %v1519 = vld [vmem:[#allocation4 + $0x18] sm:$0xff]
          %v1520 = vld [vmem:[#allocation4 + $0x20] sm:$0xff]
          %v1521 = vld [vmem:[#allocation4 + $0x28] sm:$0xff]
          %v1522 = vld [vmem:[#allocation4 + $0x30] sm:$0xff]
          %v1523 = vld [vmem:[#allocation4 + $0x38] sm:$0xff]
          %v1524 = vld [vmem:[#allocation4 + $0x40] sm:$0xff]
          %v1525 = vld [vmem:[#allocation4 + $0x48] sm:$0xff]
          %v1526 = vld [vmem:[#allocation4 + $0x50] sm:$0xff]
          %v1527 = vld [vmem:[#allocation4 + $0x58] sm:$0xff]
          %v1528 = vld [vmem:[#allocation4 + $0x60] sm:$0xff]
          %v1529 = vld [vmem:[#allocation4 + $0x68] sm:$0xff]
          %v1530 = vld [vmem:[#allocation4 + $0x70] sm:$0xff]
          %v1531 = vld [vmem:[#allocation4 + $0x78] sm:$0xff]
          %v1532 = vrcp.pop %v1516
          %v1533 = vrcp.pop %v1517
          %v1534 = vrcp.pop %v1518
          %v1535 = vrcp.pop %v1519
          %v1536 = vrcp.pop %v1520
          %v1537 = vrcp.pop %v1521
          %v1538 = vrcp.pop %v1522
          %v1539 = vrcp.pop %v1523
          %v1540 = vrcp.pop %v1524
          %v1541 = vrcp.pop %v1525
          %v1542 = vrcp.pop %v1526
          %v1543 = vrcp.pop %v1527
          %v1544 = vrcp.pop %v1528
          %v1545 = vrcp.pop %v1529
          %v1546 = vrcp.pop %v1530
          %v1547 = vrcp.pop %v1531
          %v1548 = vld [vmem:[#allocation5] sm:$0xff]
          %v1549 = vld [vmem:[#allocation5 + $0x8] sm:$0xff]
          %v1550 = vld [vmem:[#allocation5 + $0x10] sm:$0xff]
          %v1551 = vld [vmem:[#allocation5 + $0x18] sm:$0xff]
          %v1552 = vld [vmem:[#allocation5 + $0x20] sm:$0xff]
          %v1553 = vld [vmem:[#allocation5 + $0x28] sm:$0xff]
          %v1554 = vld [vmem:[#allocation5 + $0x30] sm:$0xff]
          %v1555 = vld [vmem:[#allocation5 + $0x38] sm:$0xff]
          %v1556 = vld [vmem:[#allocation5 + $0x40] sm:$0xff]
          %v1557 = vld [vmem:[#allocation5 + $0x48] sm:$0xff]
          %v1558 = vld [vmem:[#allocation5 + $0x50] sm:$0xff]
          %v1559 = vld [vmem:[#allocation5 + $0x58] sm:$0xff]
          %v1560 = vld [vmem:[#allocation5 + $0x60] sm:$0xff]
          %v1561 = vld [vmem:[#allocation5 + $0x68] sm:$0xff]
          %v1562 = vld [vmem:[#allocation5 + $0x70] sm:$0xff]
          %v1563 = vld [vmem:[#allocation5 + $0x78] sm:$0xff]
          %1565 = vset.pattern.permute.xlu0 0
          %1566 = vperm.xlu0 %1565, %v1532
          %v1567 = vpop.permute.xlu0 %1566
          %1570 = vset.pattern.permute.xlu0 0
          %1571 = vperm.xlu0 %1570, %v1533
          %v1572 = vpop.permute.xlu0 %1571
          %1575 = vset.pattern.permute.xlu0 0
          %1576 = vperm.xlu0 %1575, %v1534
          %v1577 = vpop.permute.xlu0 %1576
          %1580 = vset.pattern.permute.xlu0 0
          %1581 = vperm.xlu0 %1580, %v1535
          %v1582 = vpop.permute.xlu0 %1581
          %1585 = vset.pattern.permute.xlu0 0
          %1586 = vperm.xlu0 %1585, %v1536
          %v1587 = vpop.permute.xlu0 %1586
          %1590 = vset.pattern.permute.xlu0 0
          %1591 = vperm.xlu0 %1590, %v1537
          %v1592 = vpop.permute.xlu0 %1591
          %1595 = vset.pattern.permute.xlu0 0
          %1596 = vperm.xlu0 %1595, %v1538
          %v1597 = vpop.permute.xlu0 %1596
          %1600 = vset.pattern.permute.xlu0 0
          %1601 = vperm.xlu0 %1600, %v1539
          %v1602 = vpop.permute.xlu0 %1601
          %1605 = vset.pattern.permute.xlu0 0
          %1606 = vperm.xlu0 %1605, %v1540
          %v1607 = vpop.permute.xlu0 %1606
          %1610 = vset.pattern.permute.xlu0 0
          %1611 = vperm.xlu0 %1610, %v1541
          %v1612 = vpop.permute.xlu0 %1611
          %1615 = vset.pattern.permute.xlu0 0
          %1616 = vperm.xlu0 %1615, %v1542
          %v1617 = vpop.permute.xlu0 %1616
          %1620 = vset.pattern.permute.xlu0 0
          %1621 = vperm.xlu0 %1620, %v1543
          %v1622 = vpop.permute.xlu0 %1621
          %1625 = vset.pattern.permute.xlu0 0
          %1626 = vperm.xlu0 %1625, %v1544
          %v1627 = vpop.permute.xlu0 %1626
          %1630 = vset.pattern.permute.xlu0 0
          %1631 = vperm.xlu0 %1630, %v1545
          %v1632 = vpop.permute.xlu0 %1631
          %1635 = vset.pattern.permute.xlu0 0
          %1636 = vperm.xlu0 %1635, %v1546
          %v1637 = vpop.permute.xlu0 %1636
          %1640 = vset.pattern.permute.xlu0 0
          %1641 = vperm.xlu0 %1640, %v1547
          %v1642 = vpop.permute.xlu0 %1641
          %v1644 = vmul.f32 %v1548, %v1567
          %v1645 = vmul.f32 %v1549, %v1572
          %v1646 = vmul.f32 %v1550, %v1577
          %v1647 = vmul.f32 %v1551, %v1582
          %v1648 = vmul.f32 %v1552, %v1587
          %v1649 = vmul.f32 %v1553, %v1592
          %v1650 = vmul.f32 %v1554, %v1597
          %v1651 = vmul.f32 %v1555, %v1602
          %v1652 = vmul.f32 %v1556, %v1607
          %v1653 = vmul.f32 %v1557, %v1612
          %v1654 = vmul.f32 %v1558, %v1617
          %v1655 = vmul.f32 %v1559, %v1622
          %v1656 = vmul.f32 %v1560, %v1627
          %v1657 = vmul.f32 %v1561, %v1632
          %v1658 = vmul.f32 %v1562, %v1637
          %v1659 = vmul.f32 %v1563, %v1642
          %v1660 = vpack.c.bf16 %v1645, %v1644
          %v1661 = vpack.c.bf16 %v1647, %v1646
          %v1662 = vpack.c.bf16 %v1649, %v1648
          %v1663 = vpack.c.bf16 %v1651, %v1650
          %v1664 = vpack.c.bf16 %v1653, %v1652
          %v1665 = vpack.c.bf16 %v1655, %v1654
          %v1666 = vpack.c.bf16 %v1657, %v1656
          %v1667 = vpack.c.bf16 %v1659, %v1658
          %v1668 = vld [vmem:[%s4] sm:$0x3]
          %v1669 = vld [vmem:[%s5] sm:$0xf]
          %1671 = vset.pattern.permute.xlu0 0
          %1672 = vperm.xlu0 %1671, %v1669
          %v1673 = vpop.permute.xlu0 %1672
          %1675 = vmatprep.subr.bf16.mxu0 0
          %1676 = vmatpush1.bf16.xpose.msra.mxu0 %v1667
          %1677 = vmatprep.subr.bf16.mxu0 0
          %1678 = vmatpush1.bf16.xpose.msra.mxu0 %v1666
          %1679 = vmatprep.subr.bf16.mxu0 0
          %1680 = vmatpush1.bf16.xpose.msra.mxu0 %v1665
          %1681 = vmatprep.subr.bf16.mxu0 0
          %1682 = vmatpush1.bf16.xpose.msra.mxu0 %v1664
          %1683 = vmatprep.subr.bf16.mxu0 0
          %1684 = vmatpush1.bf16.xpose.msra.mxu0 %v1663
          %1685 = vmatprep.subr.bf16.mxu0 0
          %1686 = vmatpush1.bf16.xpose.msra.mxu0 %v1662
          %1687 = vmatprep.subr.bf16.mxu0 0
          %1688 = vmatpush1.bf16.xpose.msra.mxu0 %v1661
          %1689 = vmatprep.subr.bf16.mxu0 0
          %1690 = vmatpush1.bf16.xpose.msra.mxu0 %v1660
          %1691 = vmatprep.subr.bf16.mxu0 0
          %1692 = vmatpush2.bf16.xpose.msra.mxu0 0
          %1693 = vmatprep.subr.bf16.mxu0 0
          %1694 = vmatpush2.bf16.xpose.msra.mxu0 0
          %1695 = vmatprep.subr.bf16.mxu0 0
          %1696 = vmatpush2.bf16.xpose.msra.mxu0 0
          %1697 = vmatprep.subr.bf16.mxu0 0
          %1698 = vmatpush2.bf16.xpose.msra.mxu0 0
          %1699 = vmatprep.subr.bf16.mxu0 0
          %1700 = vmatpush2.bf16.xpose.msra.mxu0 0
          %1701 = vmatprep.subr.bf16.mxu0 0
          %1702 = vmatpush2.bf16.xpose.msra.mxu0 0
          %1703 = vmatprep.subr.bf16.mxu0 0
          %1704 = vmatpush2.bf16.xpose.msra.mxu0 0
          %1705 = vmatprep.subr.bf16.mxu0 0
          %1706 = vmatpush2.bf16.xpose.msra.mxu0 0
          %1707 = vmatprep.mubr.bf16.mxu0 0
          %1708 = vmatmul.mubr.bf16.gmra.mxu0 %v1668
          %v1709 = vpop.f32.mrf.mxu0
          %v1710 = vadd.f32 %v1673, %v1709
          %v1711 = vpop.f32.mrf.mxu0
          %v1712 = vpop.f32.mrf.mxu0
          %v1713 = vpop.f32.mrf.mxu0
          %1714 = vdwg.mxu0
          %v1715 = vld [vmem:[%s292] sm:$0xf]
          %v1716 = vadd.f32 %v1710, %v1715
          %1717 = vst [vmem:[%s334] sm:$0xf] %v1716
        $region60: #{tpu_custom_call.1} parent=43 // pred_fallthru
          _
        %s1718 = sand.u32 %s195, 1
        %s1719 = scalar_lea.sflag [#allocation8], %s1718
        %s1720 = sand.u32 %s195, 1
        %s1721 = smul.addr %s1720, 4
        %s1722 = scalar_lea.vmem [#allocation11], %s1721
        // Predicated region
        $region61: #{tpu_custom_call.1} parent=43 // pred_check
          %p1723 = pneg %p205
        $region62: #{tpu_custom_call.1} parent=43 // pred_check_branch
          %1725 = sbr.rel (%p1723) target = $region64
        $region63: #{tpu_custom_call.1} parent=43 // pred_region
          %s1727 = ssub.s32 64, 64
          %1728 = vsyncadd %s1719, %s1727
          %s1729 = smul.addr %s31, 2
          %s1730 = sadd.s32 %s32, %s1729
          %s1731 = smul.addr %s1730, 64
          %s1732 = scalar_lea.hbm %s6, %s1731
          %s1734 = sshll.u32 %s1722, 4
          %s1735 = int_to_ptr.vmem [resolvable:$true] %s1734
          %1737 = dma.vmem_to_hbm [thread:$0]  %s1735, 64, %s1732, %s1719
        $region64: #{tpu_custom_call.1} parent=43 // pred_fallthru
          _
      $region44: #{tpu_custom_call.1} parent=5 // pred_fallthru
        _
      %p1738 = scmp.le.s32.totalorder 2, %s21
      // Predicated region
      $region65: #{tpu_custom_call.1} parent=5 // pred_check
        %p1739 = pneg %p1738
      $region66: #{tpu_custom_call.1} parent=5 // pred_check_branch
        %1741 = sbr.rel (%p1739) target = $region68
      $region67: #{tpu_custom_call.1} parent=5 // pred_region
        %s1742 = ssub.s32 %s21, 2
        // Predicated region
        $region69: #{tpu_custom_call.1} parent=67 // pred_check
          %p1743 = pneg %p211
        $region70: #{tpu_custom_call.1} parent=67 // pred_check_branch
          %1745 = sbr.rel (%p1743) target = $region72
        $region71: #{tpu_custom_call.1} parent=67 // pred_region
          %s1746 = sand.u32 %s196, 1
          %s1747 = scalar_lea.sflag [#allocation8], %s1746
          %s1748 = sand.u32 %s196, 1
          %s1749 = smul.addr %s1748, 4
          %s1750 = scalar_lea.vmem [#allocation11], %s1749
          %1751 = dma.done %s1747, 64
        $region72: #{tpu_custom_call.1} parent=67 // pred_fallthru
          _
      $region68: #{tpu_custom_call.1} parent=5 // pred_fallthru
        _
    $region6: #{tpu_custom_call.1} parent=1 // loop_footer
      %s25 = sadd.s32 1, %s21
    $region7: #{tpu_custom_call.1} parent=1 // loop_footer_branch
      %20 = sbr.rel target = $region3
    $region8: #{tpu_custom_call.1} parent=1 // loop_exit
      _
    %1752 = vsyncpa [#allocation7], 1
    %s1753 = scalar_lea.sflag [#allocation7], 1
    %1754 = vsyncpa %s1753, 1
    %1755 = vsyncpa [#allocation10], 1
    %s1756 = scalar_lea.sflag [#allocation10], 1
    %1757 = vsyncpa %s1756, 1
    %1758 = vsyncpa [#allocation8], 1
    %s1759 = scalar_lea.sflag [#allocation8], 1
    %1760 = vsyncpa %s1759, 1

</llo_original>
